<compile_context>
chip_gen: v7x
topology: tpu7x:2x2x1
jax: 0.10.0
libtpu: 0.0.40
codegen_flags: <defaults>
</compile_context>

<pallas_src>
import functools
import math

import jax
import jax.numpy as jnp
from jax.experimental import pallas as pl
from jax.experimental.pallas import tpu as pltpu


def _rup(x, m):
    return ((x + m - 1) // m) * m


def _pick_tile(dim, target, quantum):
    """Largest divisor of `dim` that is a multiple of `quantum` and <= target."""
    best = None
    d = quantum
    lim = min(dim, target)
    while d <= lim:
        if dim % d == 0:
            best = d
        d += quantum
    return best


# ---------------------------------------------------------------------------
# Pallas kernels
# ---------------------------------------------------------------------------
def _matmul_bias_kernel(x_ref, w_ref, b_ref, *rest, relu, has_res):
    """bf16 (tm,tk)@(tk,tn) accumulated in f32 over grid axis 2; epilogue adds
    bias, optional fused residual, optional ReLU. BN scale pre-folded into w."""
    if has_res:
        res_ref, o_ref, acc_ref = rest
    else:
        o_ref, acc_ref = rest
        res_ref = None

    @pl.when(pl.program_id(2) == 0)
    def _():
        acc_ref[...] = jnp.zeros_like(acc_ref)

    acc_ref[...] += jnp.dot(x_ref[...], w_ref[...],
                            preferred_element_type=jnp.float32)

    @pl.when(pl.program_id(2) == pl.num_programs(2) - 1)
    def _():
        y = acc_ref[...] + b_ref[...]
        if has_res:
            y = y + res_ref[...].astype(jnp.float32)
        if relu:
            y = jnp.maximum(y, 0.0)
        o_ref[...] = y.astype(o_ref.dtype)


def _conv_taps_kernel(x_ref, w_ref, b_ref, o_ref, acc_ref, *, offsets, tm, relu):
    """Stride-1 kxk conv, flat-shift form.

    x_ref: (1, L, Cin) — whole padded image, flattened, VMEM-resident.
    w_ref: (T, Cin, tn) — per-tap weight panels (BN scale folded).
    For output flat rows [m0, m0+tm): tap t reads rows [m0+off_t, m0+off_t+tm)
    (a contiguous window), so every matmul is a plain 2-D (tm,Cin)@(Cin,tn)."""
    m0 = pl.program_id(2) * tm
    for t, off in enumerate(offsets):
        xs = x_ref[0, pl.ds(m0 + off, tm), :]
        part = jnp.dot(xs, w_ref[t], preferred_element_type=jnp.float32)
        if t == 0:
            acc_ref[...] = part
        else:
            acc_ref[...] += part
    y = acc_ref[...] + b_ref[...]
    if relu:
        y = jnp.maximum(y, 0.0)
    o_ref[0] = y.astype(o_ref.dtype)


def _maxpool_kernel(*refs, k, Ho):
    """Inputs: k refs of shape (1, Hp/2, 2, Wo, C) (W-shifted + W-strided views
    with the H axis split into even/odd phases).  Output (1, Ho, Wo, C): the
    9-tap max, with the stride-2 H subsample done via the phase dim."""
    x_refs, o_ref = refs[:-1], refs[-1]
    res = None
    for x_ref in x_refs:
        for dy in range(k):
            phase, start = dy % 2, dy // 2
            v = x_ref[0, start:start + Ho, phase, :, :]
            res = v if res is None else jnp.maximum(res, v)
    o_ref[0] = res


def _global_avg_pool_kernel(x_ref, o_ref, *, inv):
    # x_ref: (1, H*W, C) -> mean over the sublane (H*W) axis, C lane-dense.
    o_ref[...] = jnp.sum(x_ref[...].astype(jnp.float32), axis=1,
                         keepdims=True) * inv


# ---------------------------------------------------------------------------
# Pallas wrappers
# ---------------------------------------------------------------------------
def pallas_matmul_bias(x, w, bias, *, relu, residual=None,
                       out_dtype=jnp.bfloat16,
                       tm_max=512, tn_max=512, tk_max=512):
    """(M,K) @ (K,N) + bias[N] (+ residual[M,N]) (+ ReLU).

    Tiles are chosen as divisors of M/K/N wherever possible so that no jnp.pad
    copy of the activation and no dead MXU work is introduced.  Operands are
    bf16 (weights already prepared as bf16); accumulation/epilogue are f32."""
    M, K = x.shape
    K2, N = w.shape
    assert K == K2

    # K tiling: prefer a divisor of K; otherwise a single full-K block.
    tk = _pick_tile(K, tk_max, 128)
    Kp = K
    if tk is None:
        if K <= 2048:
            tk = K                      # full-dim block is always legal
        else:
            tk = tk_max
            Kp = _rup(K, tk)

    # N tiling.
    tn = _pick_tile(N, tn_max, 128)
    Np = N
    if tn is None:
        if N <= tn_max:
            tn = N
        else:
            tn = tn_max
            Np = _rup(N, tn)

    # M tiling.
    tm = _pick_tile(M, tm_max, 8)
    Mp = M
    if tm is None or (tm < 64 and M > tm_max):
        tm = min(tm_max, _rup(M, 8))
        Mp = _rup(M, tm)

    # Keep >=2 parallel output tiles where possible (v7x has 2 TensorCores).
    if (Mp // tm) * (Np // tn) < 2 and tm % 16 == 0 and tm >= 32:
        tm //= 2

    xp = x.astype(jnp.bfloat16)
    wp = w.astype(jnp.bfloat16)
    if Mp != M or Kp != K:
        xp = jnp.pad(xp, ((0, Mp - M), (0, Kp - K)))
    if Kp != K or Np != N:
        wp = jnp.pad(wp, ((0, Kp - K), (0, Np - N)))
    bp = bias.astype(jnp.float32).reshape(1, N)
    if Np != N:
        bp = jnp.pad(bp, ((0, 0), (0, Np - N)))

    inputs = [xp, wp, bp]
    in_specs = [
        pl.BlockSpec((tm, tk), lambda i, j, k: (i, k)),
        pl.BlockSpec((tk, tn), lambda i, j, k: (k, j)),
        pl.BlockSpec((1, tn), lambda i, j, k: (0, j)),
    ]
    has_res = residual is not None
    if has_res:
        rp = residual.astype(jnp.bfloat16)
        if Mp != M or Np != N:
            rp = jnp.pad(rp, ((0, Mp - M), (0, Np - N)))
        inputs.append(rp)
        in_specs.append(pl.BlockSpec((tm, tn), lambda i, j, k: (i, j)))

    out = pl.pallas_call(
        functools.partial(_matmul_bias_kernel, relu=relu, has_res=has_res),
        out_shape=jax.ShapeDtypeStruct((Mp, Np), out_dtype),
        grid_spec=pltpu.PrefetchScalarGridSpec(
            num_scalar_prefetch=0,
            grid=(Mp // tm, Np // tn, Kp // tk),
            in_specs=in_specs,
            out_specs=pl.BlockSpec((tm, tn), lambda i, j, k: (i, j)),
            scratch_shapes=[pltpu.VMEM((tm, tn), jnp.float32)],
        ),
        compiler_params=pltpu.CompilerParams(
            dimension_semantics=("parallel", "parallel", "arbitrary")),
    )(*inputs)
    if Mp != M or Np != N:
        out = out[:M, :N]
    return out


def pallas_conv3x3_s1(x, w_taps, bias, *, kh, kw, padding, relu=True,
                      tm_max=512, tn_max=512):
    """Stride-1 'same' kxk conv on an NHWC bf16 activation, no HBM im2col.

    The padded image is flattened per image to (L, Cin); each tap (dy,dx) is a
    contiguous window shifted by dy*Wp+dx, so the kernel accumulates kh*kw
    plain 2-D matmuls on VMEM-resident data.  The kw-1 junk columns on the
    padded-width output grid are sliced off afterwards."""
    N, H, W, Cin = x.shape
    T, Cin2, Cout = w_taps.shape
    assert T == kh * kw and Cin2 == Cin and padding == (kh - 1) // 2
    Ho, Wo = H, W
    Wp = W + 2 * padding
    M = Ho * Wp                       # output computed on the padded-width grid

    tn = _pick_tile(Cout, tn_max, 128) or Cout
    # Cap the (double-buffered) per-tap weight panel at ~4 MiB per buffer.
    while tn > 128 and kh * kw * Cin * tn * 2 > (4 << 20):
        nxt = _pick_tile(Cout, tn // 2, 128)
        if not nxt:
            break
        tn = nxt

    tm = _pick_tile(M, tm_max, 8)
    if tm is None or (tm < 64 and M > tm_max):
        tm = min(tm_max, _rup(M, 8))
    Mp = _rup(M, tm)

    max_off = (kh - 1) * Wp + (kw - 1)
    L_needed = Mp + max_off
    Hp_ext = -(-L_needed // Wp)                 # total padded rows (incl. top)
    pad_bottom = Hp_ext - H - padding           # >= padding by construction
    xp = jnp.pad(x, ((0, 0), (padding, pad_bottom), (padding, padding), (0, 0)))
    L = Hp_ext * Wp
    xf = xp.reshape(N, L, Cin)
    bp = bias.astype(jnp.float32).reshape(1, Cout)
    offsets = tuple(dy * Wp + dx for dy in range(kh) for dx in range(kw))

    out = pl.pallas_call(
        functools.partial(_conv_taps_kernel, offsets=offsets, tm=tm, relu=relu),
        out_shape=jax.ShapeDtypeStruct((N, Mp, Cout), jnp.bfloat16),
        grid_spec=pltpu.PrefetchScalarGridSpec(
            num_scalar_prefetch=0,
            grid=(N, Cout // tn, Mp // tm),
            in_specs=[
                pl.BlockSpec((1, L, Cin), lambda n, j, m: (n, 0, 0)),
                pl.BlockSpec((T, Cin, tn), lambda n, j, m: (0, 0, j)),
                pl.BlockSpec((1, tn), lambda n, j, m: (0, j)),
            ],
            out_specs=pl.BlockSpec((1, tm, tn), lambda n, j, m: (n, m, j)),
            scratch_shapes=[pltpu.VMEM((tm, tn), jnp.float32)],
        ),
        compiler_params=pltpu.CompilerParams(
            dimension_semantics=("parallel", "parallel", "parallel")),
    )(xf, w_taps, bp)
    out = out[:, :M, :].reshape(N, Ho, Wp, Cout)[:, :, :Wo, :]
    return out


def maxpool2d(x, k=3, stride=2, padding=1):
    """NHWC 3x3/stride-2 max-pool.  k W-shifted strided views feed a Pallas
    kernel (C lane-dense) that does the k H-taps and the stride-2 H subsample
    in-kernel via an even/odd H-phase reshape, emitting (Ho, Wo, C) directly."""
    assert stride == 2
    N, H, W, C = x.shape
    Ho = (H + 2 * padding - k) // stride + 1
    Wo = (W + 2 * padding - k) // stride + 1
    Hp = H + 2 * padding
    assert Hp % 2 == 0
    xp = jnp.pad(x, ((0, 0), (padding, padding), (padding, padding), (0, 0)),
                 constant_values=-jnp.inf)
    taps = [xp[:, :, dx:dx + stride * (Wo - 1) + 1:stride, :]
            .reshape(N, Hp // 2, 2, Wo, C) for dx in range(k)]
    y = pl.pallas_call(
        functools.partial(_maxpool_kernel, k=k, Ho=Ho),
        out_shape=jax.ShapeDtypeStruct((N, Ho, Wo, C), x.dtype),
        grid_spec=pltpu.PrefetchScalarGridSpec(
            num_scalar_prefetch=0,
            grid=(N,),
            in_specs=[pl.BlockSpec((1, Hp // 2, 2, Wo, C),
                                   lambda n: (n, 0, 0, 0, 0))
                      for _ in range(k)],
            out_specs=pl.BlockSpec((1, Ho, Wo, C), lambda n: (n, 0, 0, 0)),
        ),
        compiler_params=pltpu.CompilerParams(dimension_semantics=("parallel",)),
    )(*taps)
    return y


def pallas_global_avg_pool(x):
    """NHWC (N,H,W,C) -> (N,C) mean, C kept on lanes."""
    N, H, W, C = x.shape
    xr = x.reshape(N, H * W, C)
    out = pl.pallas_call(
        functools.partial(_global_avg_pool_kernel, inv=1.0 / (H * W)),
        out_shape=jax.ShapeDtypeStruct((N, 1, C), jnp.float32),
        grid_spec=pltpu.PrefetchScalarGridSpec(
            num_scalar_prefetch=0,
            grid=(N,),
            in_specs=[pl.BlockSpec((1, H * W, C), lambda n: (n, 0, 0))],
            out_specs=pl.BlockSpec((1, 1, C), lambda n: (n, 0, 0)),
        ),
        compiler_params=pltpu.CompilerParams(dimension_semantics=("parallel",)),
    )(xr)
    return out.reshape(N, C)


# ---------------------------------------------------------------------------
# JAX glue: convs, bottleneck, full forward (weights already prepared)
# ---------------------------------------------------------------------------
def conv_1x1(x, wmat, bias, *, stride, relu, residual=None):
    N, H, W, Cin = x.shape
    if stride != 1:
        x = x[:, ::stride, ::stride, :]
    _, Ho, Wo, _ = x.shape
    Cout = wmat.shape[1]
    res2d = None if residual is None else residual.reshape(N * Ho * Wo, Cout)
    y = pallas_matmul_bias(x.reshape(N * Ho * Wo, Cin), wmat, bias,
                           relu=relu, residual=res2d)
    return y.reshape(N, Ho, Wo, Cout)


def conv_kxk_im2col(x, wmat, bias, *, kh, kw, stride, padding, relu):
    # Only used for the 7x7 stem and the three stride-2 3x3 convs (see TODO).
    N, H, W, Cin = x.shape
    Ho = (H + 2 * padding - kh) // stride + 1
    Wo = (W + 2 * padding - kw) // stride + 1
    xp = jnp.pad(x, ((0, 0), (padding, padding), (padding, padding), (0, 0)))
    cols = [xp[:, dy:dy + stride * (Ho - 1) + 1:stride,
               dx:dx + stride * (Wo - 1) + 1:stride, :]
            for dy in range(kh) for dx in range(kw)]
    patches = jnp.concatenate(cols, axis=-1).reshape(N * Ho * Wo, kh * kw * Cin)
    y = pallas_matmul_bias(patches, wmat, bias, relu=relu)
    return y.reshape(N, Ho, Wo, wmat.shape[1])


def bottleneck(x, blk):
    out = conv_1x1(x, blk['w1'], blk['b1'], stride=1, relu=True)
    if blk['stride'] == 1:
        out = pallas_conv3x3_s1(out, blk['w2_taps'], blk['b2'],
                                kh=3, kw=3, padding=1, relu=True)
    else:
        out = conv_kxk_im2col(out, blk['w2_mat'], blk['b2'], kh=3, kw=3,
                              stride=blk['stride'], padding=1, relu=True)
    if 'wd' in blk:
        identity = conv_1x1(x, blk['wd'], blk['bd'], stride=blk['stride'],
                            relu=False)
    else:
        identity = x
    # conv3: BN affine + residual add + ReLU all fused in the matmul epilogue.
    return conv_1x1(out, blk['w3'], blk['b3'], stride=1, relu=True,
                    residual=identity)


def encoder_cnn_forward(params, images):
    # images: NCHW float32 (PyTorch convention) -> NHWC bf16 once, up front.
    x = jnp.transpose(images, (0, 2, 3, 1)).astype(jnp.bfloat16)
    x = conv_kxk_im2col(x, params['stem_w'], params['stem_b'],
                        kh=7, kw=7, stride=2, padding=3, relu=True)
    x = maxpool2d(x, k=3, stride=2, padding=1)
    for blocks in params['layers']:
        for blk in blocks:
            x = bottleneck(x, blk)
    pooled = pallas_global_avg_pool(x)                     # (N, 2048) f32
    # embed = nn.Linear(2048, embed_size)
    return pallas_matmul_bias(pooled, params['embed_w'], params['embed_b'],
                              relu=False, out_dtype=jnp.float32)


# ---------------------------------------------------------------------------
# Deterministic synthetic parameter init (ResNet-50 geometry) + one-time prep
# ---------------------------------------------------------------------------
class _KeyGen:
    def __init__(self, key):
        self.key = key

    def __call__(self):
        self.key, k = jax.random.split(self.key)
        return k


def init_encoder_params(key, embed_size):
    kg = _KeyGen(key)
    eps = 1e-5

    def conv_w(cout, cin, k):
        fan = cin * k * k
        return (jax.random.normal(kg(), (cout, cin, k, k), jnp.float32)
                * math.sqrt(2.0 / fan))

    def bn_fold(c):
        gamma = 1.0 + 0.1 * jax.random.normal(kg(), (c,), jnp.float32)
        beta = 0.1 * jax.random.normal(kg(), (c,), jnp.float32)
        mean = 0.1 * jax.random.normal(kg(), (c,), jnp.float32)
        var = 1.0 + 0.1 * jax.random.uniform(kg(), (c,), jnp.float32)
        scale = gamma / jnp.sqrt(var + eps)
        bias = beta - mean * scale
        return scale, bias

    params = {}
    params['conv1_w'] = conv_w(64, 3, 7)
    params['bn1_s'], params['bn1_b'] = bn_fold(64)

    layers = []
    in_ch = 64
    cfg = [(3, 64, 1), (4, 128, 2), (6, 256, 2), (3, 512, 2)]
    for nblocks, width, stride in cfg:
        blocks = []
        for b in range(nblocks):
            s = stride if b == 0 else 1
            out_ch = width * 4
            blk = {'stride': s}
            blk['conv1_w'] = conv_w(width, in_ch, 1)
            blk['bn1_s'], blk['bn1_b'] = bn_fold(width)
            blk['conv2_w'] = conv_w(width, width, 3)
            blk['bn2_s'], blk['bn2_b'] = bn_fold(width)
            blk['conv3_w'] = conv_w(out_ch, width, 1)
            blk['bn3_s'], blk['bn3_b'] = bn_fold(out_ch)
            if b == 0:
                blk['down_w'] = conv_w(out_ch, in_ch, 1)
                blk['down_s'], blk['down_b'] = bn_fold(out_ch)
            blocks.append(blk)
            in_ch = out_ch
        layers.append(blocks)
    params['layers'] = layers

    params['embed_w'] = (jax.random.normal(kg(), (embed_size, 2048), jnp.float32)
                         * (1.0 / math.sqrt(2048.0)))
    params['embed_b'] = 0.01 * jax.random.normal(kg(), (embed_size,), jnp.float32)
    return params


def fold_params(raw):
    """One-time weight prep (NOT per forward): fold the BN scale into the
    weights, transpose to matmul / per-tap layout and cast to bf16."""
    def mat_1x1(w, scale):
        return (w[:, :, 0, 0] * scale[:, None]).T.astype(jnp.bfloat16)

    def mat_im2col(w, scale):
        cout, cin, kh, kw = w.shape
        m = (w * scale[:, None, None, None]).transpose(2, 3, 1, 0)
        return m.reshape(kh * kw * cin, cout).astype(jnp.bfloat16)

    def taps(w, scale):
        cout, cin, kh, kw = w.shape
        m = (w * scale[:, None, None, None]).transpose(2, 3, 1, 0)
        return m.reshape(kh * kw, cin, cout).astype(jnp.bfloat16)

    p = {
        'stem_w': mat_im2col(raw['conv1_w'], raw['bn1_s']),
        'stem_b': raw['bn1_b'],
        'embed_w': raw['embed_w'].T.astype(jnp.bfloat16),
        'embed_b': raw['embed_b'],
        'layers': [],
    }
    for blocks in raw['layers']:
        pblocks = []
        for blk in blocks:
            q = {
                'stride': blk['stride'],
                'w1': mat_1x1(blk['conv1_w'], blk['bn1_s']), 'b1': blk['bn1_b'],
                'b2': blk['bn2_b'],
                'w3': mat_1x1(blk['conv3_w'], blk['bn3_s']), 'b3': blk['bn3_b'],
            }
            if blk['stride'] == 1:
                q['w2_taps'] = taps(blk['conv2_w'], blk['bn2_s'])
            else:
                q['w2_mat'] = mat_im2col(blk['conv2_w'], blk['bn2_s'])
            if 'down_w' in blk:
                q['wd'] = mat_1x1(blk['down_w'], blk['down_s'])
                q['bd'] = blk['down_b']
            pblocks.append(q)
        p['layers'].append(pblocks)
    return p


if __name__ == "__main__":
    key = jax.random.PRNGKey(0)
    pkey, xkey = jax.random.split(key)

    embed_size = 32
    raw_params = init_encoder_params(pkey, embed_size)
    params = fold_params(raw_params)            # one-time weight preparation
    images = jax.random.normal(xkey, (2, 3, 64, 64), jnp.float32)  # NCHW

    features = encoder_cnn_forward(params, images)
    features = jax.block_until_ready(features)

    assert features.shape == (2, embed_size), features.shape
    assert features.dtype == jnp.float32
    assert bool(jnp.all(jnp.isfinite(features)))
    print("KERNEL_OK")
</pallas_src>

<mosaic_0001>
module attributes {stable_mosaic.version = 11 : i64} {
  func.func @_matmul_bias_kernel(%arg0: i32, %arg1: i32, %arg2: i32, %arg3: memref<512x147xbf16, #tpu.memory_space<vmem>>, %arg4: memref<147x64xbf16, #tpu.memory_space<vmem>>, %arg5: memref<1x64xf32, #tpu.memory_space<vmem>>, %arg6: memref<512x64xbf16, #tpu.memory_space<vmem>>, %arg7: memref<512x64xf32, #tpu.memory_space<vmem>>) attributes {dimension_semantics = [#tpu.dimension_semantics<parallel>, #tpu.dimension_semantics<parallel>, #tpu.dimension_semantics<arbitrary>], iteration_bounds = array<i64: 4, 1, 1>, scalar_prefetch = 0 : i64, scratch_operands = 1 : i64, tpu.core_type = #tpu.core_type<tc>, window_params = [{transform_indices = @transform_0, window_bounds = array<i64: 512, 147>}, {transform_indices = @transform_1, window_bounds = array<i64: 147, 64>}, {transform_indices = @transform_2, window_bounds = array<i64: 1, 64>}, {transform_indices = @transform_3, window_bounds = array<i64: 512, 64>}]} {
    %c0_i32 = arith.constant 0 : i32
    %0 = arith.cmpi eq, %arg2, %c0_i32 : i32
    %1 = arith.extui %0 : i1 to i32
    %c0_i32_0 = arith.constant 0 : i32
    %2 = arith.cmpi ne, %1, %c0_i32_0 : i32
    scf.if %2 {
      %cst_10 = arith.constant 0.000000e+00 : f32
      %12 = vector.broadcast %cst_10 : f32 to vector<512x64xf32>
      %c0_11 = arith.constant 0 : index
      %c0_12 = arith.constant 0 : index
      %13 = vector.load %arg7[%c0_11, %c0_12] : memref<512x64xf32, #tpu.memory_space<vmem>>, vector<512x64xf32>
      tpu.vector_store %arg7[%c0_11, %c0_12], %12 {strides = array<i32>} : memref<512x64xf32, #tpu.memory_space<vmem>>, vector<512x64xf32>,
    } else {
    }
    %c0 = arith.constant 0 : index
    %c0_1 = arith.constant 0 : index
    %3 = vector.load %arg7[%c0, %c0_1] : memref<512x64xf32, #tpu.memory_space<vmem>>, vector<512x64xf32>
    %c0_2 = arith.constant 0 : index
    %c0_3 = arith.constant 0 : index
    %4 = vector.load %arg3[%c0_2, %c0_3] : memref<512x147xbf16, #tpu.memory_space<vmem>>, vector<512x147xbf16>
    %c0_4 = arith.constant 0 : index
    %c0_5 = arith.constant 0 : index
    %5 = vector.load %arg4[%c0_4, %c0_5] : memref<147x64xbf16, #tpu.memory_space<vmem>>, vector<147x64xbf16>
    %cst = arith.constant dense<0.000000e+00> : vector<512x64xf32>
    %6 = tpu.matmul %4, %5, %cst {dimension_numbers = #tpu.dot_dimension_numbers<[1], [0], [0], [1], [0, 0, 1, 1], [], []>} : vector<512x147xbf16>, vector<147x64xbf16>, vector<512x64xf32> -> vector<512x64xf32>
    %7 = arith.addf %3, %6 : vector<512x64xf32>
    %c0_6 = arith.constant 0 : index
    %c0_7 = arith.constant 0 : index
    %8 = vector.load %arg7[%c0_6, %c0_7] : memref<512x64xf32, #tpu.memory_space<vmem>>, vector<512x64xf32>
    tpu.vector_store %arg7[%c0_6, %c0_7], %7 {strides = array<i32>} : memref<512x64xf32, #tpu.memory_space<vmem>>, vector<512x64xf32>,
    %c0_i32_8 = arith.constant 0 : i32
    %9 = arith.cmpi eq, %arg2, %c0_i32_8 : i32
    %10 = arith.extui %9 : i1 to i32
    %c0_i32_9 = arith.constant 0 : i32
    %11 = arith.cmpi ne, %10, %c0_i32_9 : i32
    scf.if %11 {
      %c0_10 = arith.constant 0 : index
      %c0_11 = arith.constant 0 : index
      %12 = vector.load %arg7[%c0_10, %c0_11] : memref<512x64xf32, #tpu.memory_space<vmem>>, vector<512x64xf32>
      %c0_12 = arith.constant 0 : index
      %c0_13 = arith.constant 0 : index
      %13 = vector.load %arg5[%c0_12, %c0_13] : memref<1x64xf32, #tpu.memory_space<vmem>>, vector<1x64xf32>
      %14 = vector.broadcast %13 : vector<1x64xf32> to vector<512x64xf32>
      %15 = arith.addf %12, %14 : vector<512x64xf32>
      %cst_14 = arith.constant 0.000000e+00 : f32
      %16 = vector.broadcast %cst_14 : f32 to vector<512x64xf32>
      %17 = arith.maximumf %15, %16 : vector<512x64xf32>
      %18 = arith.truncf %17 : vector<512x64xf32> to vector<512x64xbf16>
      %c0_15 = arith.constant 0 : index
      %c0_16 = arith.constant 0 : index
      %19 = vector.load %arg6[%c0_15, %c0_16] : memref<512x64xbf16, #tpu.memory_space<vmem>>, vector<512x64xbf16>
      tpu.vector_store %arg6[%c0_15, %c0_16], %18 {strides = array<i32>} : memref<512x64xbf16, #tpu.memory_space<vmem>>, vector<512x64xbf16>,
    } else {
    }
    return
  }
  func.func @transform_0(%arg0: i32, %arg1: i32, %arg2: i32) -> (i32, i32) {
    %c0_i32 = arith.constant 0 : i32
    return %arg0, %arg2 : i32, i32
  }
  func.func @transform_1(%arg0: i32, %arg1: i32, %arg2: i32) -> (i32, i32) {
    %c0_i32 = arith.constant 0 : i32
    return %arg2, %arg1 : i32, i32
  }
  func.func @transform_2(%arg0: i32, %arg1: i32, %arg2: i32) -> (i32, i32) {
    %c0_i32 = arith.constant 0 : i32
    %c0_i32_0 = arith.constant 0 : i32
    return %c0_i32, %arg1 : i32, i32
  }
  func.func @transform_3(%arg0: i32, %arg1: i32, %arg2: i32) -> (i32, i32) {
    %c0_i32 = arith.constant 0 : i32
    return %arg0, %arg1 : i32, i32
  }
}

</mosaic_0001>

<llo_original>
// kernel: tpu_custom_call.1
$region0: #{tpu_custom_call.1}
  #allocation0 [shape = 'u32[]', space=smem, size = 0x4, offset = 0x4, fixed_abs, tag = 'smem constant byte address 0x4 - core index']
  #allocation1 [shape = 'u32[144,128]{1,0:T(1,128)}', space=vmem, size = 0x12000, scoped, tag = 'internal scratch']
  #allocation2 [shape = 'f32[512,64]{1,0:T(8,128)}', space=vmem, size = 0x40000, scoped, tag = 'scratch operand']
  %s0 = inlined_call_operand.vmem [shape: bf16[2048,147], index: 0, kind: input, shape index: {}]
  %s1 = inlined_call_operand.vmem [shape: bf16[147,64], index: 1, kind: input, shape index: {}]
  %s2 = inlined_call_operand.vmem [shape: f32[1,64], index: 2, kind: input, shape index: {}]
  %s3 = inlined_call_operand.vmem [shape: bf16[2048,64], index: 3, kind: output, shape index: {}]
  %s4 = sld [smem:[#allocation0]]
  $region53: #{tpu_custom_call.1} parent=0
    _
  %s6 = ssub.s32 1, %s4
  %s7 = scalar_select 0, %s6, %s4
  loop: start=0, step=1, limit=6
  $region2: #{tpu_custom_call.1} parent=0 // loop_pre_header
    _
  $region3: #{tpu_custom_call.1} parent=0 // loop_header
    %s9 = sphi 0, %s13
    %p10 = scmp.ge.s32.totalorder %s9, 6
    %s16 = sphi 0, %s35
    %s17 = sphi 0, %s31
    %s18 = sphi 0, %s27
    %s19 = sphi 0, %s16
    %s20 = sphi 0, %s17
    %s21 = sphi 0, %s18
    %s22 = sphi 0, %s19
    %s23 = sphi 0, %s20
    %s24 = sphi 0, %s21
    %s40 = sphi 0, %s42
    %s43 = sphi 0, %s40
    %s44 = sphi 0, %s43
    %s60 = sphi 0, %s44
    %s68 = sphi 0, %s70
    %s71 = sphi 0, %s68
    %s72 = sphi 0, %s71
    %s88 = sphi 0, %s72
    %s94 = sphi 0, %s96
    %s97 = sphi 0, %s94
    %s98 = sphi 0, %s97
    %s114 = sphi 0, %s98
    %s122 = sphi 0, %s124
    %s125 = sphi 0, %s122
    %s126 = sphi 0, %s125
    %s142 = sphi 0, %s126
  $region4: #{tpu_custom_call.1} parent=0 // loop_header_branch
    %12 = sbr.rel (%p10) target = $region8
  $region5: #{tpu_custom_call.1} parent=0 // loop_body
    %s14 = ssub.s32 %s9, 1
    %s15 = ssub.s32 %s9, 2
    %s25 = sadd.s32 1, %s18
    %p26 = scmp.ge.s32.totalorder %s25, 1
    %s27 = scalar_select %p26, 0, %s25
    %s28 = sadd.s32 1, %s17
    %s29 = scalar_select %p26, %s28, %s17
    %p30 = scmp.ge.s32.totalorder %s29, 1
    %s31 = scalar_select %p30, 0, %s29
    %s32 = sadd.s32 1, %s16
    %s33 = scalar_select %p30, %s32, %s16
    %p34 = scmp.ge.s32.totalorder %s33, 4
    %s35 = scalar_select %p34, 0, %s33
    %s36 = ssub.s32 %s16, %s35
    %s37 = ssub.s32 %s18, %s27
    %s38 = sor.u32 %s36, %s37
    %p39 = scmp.eq.s32.totalorder %s38, 0
    %s41 = sadd.s32 %s40, 1
    %s42 = scalar_select %p39, %s40, %s41
    %p45 = pneg %p39
    %p46 = scmp.eq.s32.totalorder %s9, 3
    %p47 = por %p45, %p46
    %p48 = scmp.ne.s32.totalorder %s40, %s43
    %p49 = scmp.eq.s32.totalorder %s9, 0
    %p50 = por %p48, %p49
    %p51 = scmp.ne.s32.totalorder %s40, %s43
    %p52 = scmp.eq.s32.totalorder %s14, 3
    %p53 = por %p51, %p52
    %p54 = scmp.ne.s32.totalorder %s43, %s44
    %p55 = scmp.eq.s32.totalorder %s14, 0
    %p56 = por %p54, %p55
    %p57 = scmp.ne.s32.totalorder %s43, %s44
    %p58 = scmp.eq.s32.totalorder %s15, 3
    %p59 = por %p57, %p58
    %p61 = scmp.ne.s32.totalorder %s44, %s60
    %p62 = scmp.eq.s32.totalorder %s15, 0
    %p63 = por %p61, %p62
    %s64 = ssub.s32 %s18, %s27
    %s65 = ssub.s32 %s17, %s31
    %s66 = sor.u32 %s64, %s65
    %p67 = scmp.eq.s32.totalorder %s66, 0
    %s69 = sadd.s32 %s68, 1
    %s70 = scalar_select %p67, %s68, %s69
    %p73 = pneg %p67
    %p74 = scmp.eq.s32.totalorder %s9, 3
    %p75 = por %p73, %p74
    %p76 = scmp.ne.s32.totalorder %s68, %s71
    %p77 = scmp.eq.s32.totalorder %s9, 0
    %p78 = por %p76, %p77
    %p79 = scmp.ne.s32.totalorder %s68, %s71
    %p80 = scmp.eq.s32.totalorder %s14, 3
    %p81 = por %p79, %p80
    %p82 = scmp.ne.s32.totalorder %s71, %s72
    %p83 = scmp.eq.s32.totalorder %s14, 0
    %p84 = por %p82, %p83
    %p85 = scmp.ne.s32.totalorder %s71, %s72
    %p86 = scmp.eq.s32.totalorder %s15, 3
    %p87 = por %p85, %p86
    %p89 = scmp.ne.s32.totalorder %s72, %s88
    %p90 = scmp.eq.s32.totalorder %s15, 0
    %p91 = por %p89, %p90
    %s92 = ssub.s32 %s17, %s31
    %p93 = scmp.eq.s32.totalorder %s92, 0
    %s95 = sadd.s32 %s94, 1
    %s96 = scalar_select %p93, %s94, %s95
    %p99 = pneg %p93
    %p100 = scmp.eq.s32.totalorder %s9, 3
    %p101 = por %p99, %p100
    %p102 = scmp.ne.s32.totalorder %s94, %s97
    %p103 = scmp.eq.s32.totalorder %s9, 0
    %p104 = por %p102, %p103
    %p105 = scmp.ne.s32.totalorder %s94, %s97
    %p106 = scmp.eq.s32.totalorder %s14, 3
    %p107 = por %p105, %p106
    %p108 = scmp.ne.s32.totalorder %s97, %s98
    %p109 = scmp.eq.s32.totalorder %s14, 0
    %p110 = por %p108, %p109
    %p111 = scmp.ne.s32.totalorder %s97, %s98
    %p112 = scmp.eq.s32.totalorder %s15, 3
    %p113 = por %p111, %p112
    %p115 = scmp.ne.s32.totalorder %s98, %s114
    %p116 = scmp.eq.s32.totalorder %s15, 0
    %p117 = por %p115, %p116
    %s118 = ssub.s32 %s16, %s35
    %s119 = ssub.s32 %s17, %s31
    %s120 = sor.u32 %s118, %s119
    %p121 = scmp.eq.s32.totalorder %s120, 0
    %s123 = sadd.s32 %s122, 1
    %s124 = scalar_select %p121, %s122, %s123
    %p127 = pneg %p121
    %p128 = scmp.eq.s32.totalorder %s9, 3
    %p129 = por %p127, %p128
    %p130 = scmp.ne.s32.totalorder %s122, %s125
    %p131 = scmp.eq.s32.totalorder %s9, 0
    %p132 = por %p130, %p131
    %p133 = scmp.ne.s32.totalorder %s122, %s125
    %p134 = scmp.eq.s32.totalorder %s14, 3
    %p135 = por %p133, %p134
    %p136 = scmp.ne.s32.totalorder %s125, %s126
    %p137 = scmp.eq.s32.totalorder %s14, 0
    %p138 = por %p136, %p137
    %p139 = scmp.ne.s32.totalorder %s125, %s126
    %p140 = scmp.eq.s32.totalorder %s15, 3
    %p141 = por %p139, %p140
    %p143 = scmp.ne.s32.totalorder %s126, %s142
    %p144 = scmp.eq.s32.totalorder %s15, 0
    %p145 = por %p143, %p144
    %p146 = scmp.le.s32.totalorder 1, %s9
    %p147 = scmp.lt.s32.totalorder %s9, 5
    %p148 = pnand %p146, %p147
    %p149 = pneg %p148
    // Predicated region
    $region9: #{tpu_custom_call.1} parent=5 // pred_check
      _
    $region10: #{tpu_custom_call.1} parent=5 // pred_check_branch
      %151 = sbr.rel (%p148) target = $region12
    $region11: #{tpu_custom_call.1} parent=5 // pred_region
      %s152 = ssub.s32 %s9, 1
      // Predicated region
      $region13: #{tpu_custom_call.1} parent=11 // pred_check
        %p153 = pneg %p84
      $region14: #{tpu_custom_call.1} parent=11 // pred_check_branch
        %155 = sbr.rel (%p153) target = $region16
      $region15: #{tpu_custom_call.1} parent=11 // pred_region
        %s156 = smul.u32 19, %s21
        %p157 = scmp.lt.s32.totalorder %s156, 18
        %s158 = scalar_select %p157, %s156, 18
        %p159 = scmp.lt.s32.totalorder %s20, 0
        %s160 = scalar_select %p159, %s20, 0
        %s161 = sadd.s32 %s160, %s158
        %s162 = smul.addr %s161, 4
        %s163 = scalar_lea.vmem %s1, %s162
        %s164 = smul.u32 19, %s21
      $region16: #{tpu_custom_call.1} parent=11 // pred_fallthru
        _
      // Predicated region
      $region17: #{tpu_custom_call.1} parent=11 // pred_check
        %p165 = pneg %p110
      $region18: #{tpu_custom_call.1} parent=11 // pred_check_branch
        %167 = sbr.rel (%p165) target = $region20
      $region19: #{tpu_custom_call.1} parent=11 // pred_region
        %p168 = scmp.lt.s32.totalorder %s20, 0
        %s169 = scalar_select %p168, %s20, 0
        %s170 = scalar_lea.vmem %s2, %s169
      $region20: #{tpu_custom_call.1} parent=11 // pred_fallthru
        _
    $region12: #{tpu_custom_call.1} parent=5 // pred_fallthru
      _
    %p171 = scmp.lt.s32.totalorder %s9, 4
    // Predicated region
    $region21: #{tpu_custom_call.1} parent=5 // pred_check
      %p172 = pneg %p171
    $region22: #{tpu_custom_call.1} parent=5 // pred_check_branch
      %174 = sbr.rel (%p172) target = $region24
    $region23: #{tpu_custom_call.1} parent=5 // pred_region
      // Predicated region
      $region25: #{tpu_custom_call.1} parent=23 // pred_check
        %p175 = pneg %p50
      $region26: #{tpu_custom_call.1} parent=23 // pred_check_branch
        %177 = sbr.rel (%p175) target = $region28
      $region27: #{tpu_custom_call.1} parent=23 // pred_region
        %s178 = smul.u32 64, %s16
        %s179 = smul.u32 2, %s18
        %p180 = scmp.lt.s32.totalorder %s178, 255
        %s181 = scalar_select %p180, %s178, 255
        %p182 = scmp.lt.s32.totalorder %s179, 1
        %s183 = scalar_select %p182, %s179, 1
        %s184 = smul.addr %s181, 2
        %s185 = sadd.s32 %s183, %s184
        %s186 = smul.addr %s185, 4
        %s187 = scalar_lea.vmem %s0, %s186
        %s188 = smul.u32 64, %s16
        %s189 = smul.u32 2, %s18
      $region28: #{tpu_custom_call.1} parent=23 // pred_fallthru
        _
    $region24: #{tpu_custom_call.1} parent=5 // pred_fallthru
      _
    %p190 = scmp.le.s32.totalorder 1, %s9
    %p191 = scmp.lt.s32.totalorder %s9, 5
    %p192 = pnand %p190, %p191
    %p193 = pneg %p192
    // Predicated region
    $region29: #{tpu_custom_call.1} parent=5 // pred_check
      _
    $region30: #{tpu_custom_call.1} parent=5 // pred_check_branch
      %195 = sbr.rel (%p192) target = $region32
    $region31: #{tpu_custom_call.1} parent=5 // pred_region
      %s196 = ssub.s32 %s9, 1
      %s197 = smul.u32 64, %s19
      %s198 = smul.u32 2, %s21
      %p199 = scmp.lt.s32.totalorder %s197, 255
      %s200 = scalar_select %p199, %s197, 255
      %p201 = scmp.lt.s32.totalorder %s198, 1
      %s202 = scalar_select %p201, %s198, 1
      %s203 = smul.addr %s200, 2
      %s204 = sadd.s32 %s202, %s203
      %s205 = smul.addr %s204, 4
      %s206 = scalar_lea.vmem %s0, %s205
      %p207 = pneg %p56
      %p208 = pneg %p53
      %s209 = smul.u32 19, %s21
      %p210 = scmp.lt.s32.totalorder %s209, 18
      %s211 = scalar_select %p210, %s209, 18
      %p212 = scmp.lt.s32.totalorder %s20, 0
      %s213 = scalar_select %p212, %s20, 0
      %s214 = sadd.s32 %s213, %s211
      %s215 = smul.addr %s214, 4
      %s216 = scalar_lea.vmem %s1, %s215
      %p217 = pneg %p84
      %p218 = pneg %p81
      %p219 = scmp.lt.s32.totalorder %s20, 0
      %s220 = scalar_select %p219, %s20, 0
      %s221 = scalar_lea.vmem %s2, %s220
      %p222 = pneg %p110
      %p223 = pneg %p107
      %p224 = pneg %p138
      %p225 = pneg %p135
      %s226 = smul.u32 64, %s19
      %p227 = scmp.lt.s32.totalorder %s226, 255
      %s228 = scalar_select %p227, %s226, 255
      %p229 = scmp.lt.s32.totalorder %s20, 0
      %s230 = scalar_select %p229, %s20, 0
      %s231 = sadd.s32 %s230, %s228
      %s232 = smul.addr %s231, 4
      %s233 = scalar_lea.vmem %s3, %s232
      %s234 = smul.u32 64, %s19
      %s235 = smul.u32 2, %s21
      %p236 = scmp.lt.s32.totalorder %s234, 255
      %s237 = scalar_select %p236, %s234, 255
      %p238 = scmp.lt.s32.totalorder %s235, 1
      %s239 = scalar_select %p238, %s235, 1
      %s240 = smul.addr %s237, 2
      %s241 = sadd.s32 %s239, %s240
      %s242 = smul.addr %s241, 4
      %s243 = scalar_lea.vmem %s0, %s242
      %s244 = smul.u32 64, %s19
      %s245 = smul.u32 2, %s21
      %s246 = smul.u32 19, %s21
      %p247 = scmp.lt.s32.totalorder %s246, 18
      %s248 = scalar_select %p247, %s246, 18
      %p249 = scmp.lt.s32.totalorder %s20, 0
      %s250 = scalar_select %p249, %s20, 0
      %s251 = sadd.s32 %s250, %s248
      %s252 = smul.addr %s251, 4
      %s253 = scalar_lea.vmem %s1, %s252
      %s254 = smul.u32 19, %s21
      %p255 = scmp.lt.s32.totalorder %s20, 0
      %s256 = scalar_select %p255, %s20, 0
      %s257 = scalar_lea.vmem %s2, %s256
      %s258 = smul.u32 64, %s19
      %p259 = scmp.lt.s32.totalorder %s258, 255
      %s260 = scalar_select %p259, %s258, 255
      %p261 = scmp.lt.s32.totalorder %s20, 0
      %s262 = scalar_select %p261, %s20, 0
      %s263 = sadd.s32 %s262, %s260
      %s264 = smul.addr %s263, 4
      %s265 = scalar_lea.vmem %s3, %s264
      %s266 = smul.u32 64, %s19
      %p268 = scmp.eq.s32.totalorder %s21, 0
      // Predicated region
      $region33: #{tpu_custom_call.1} parent=31 // pred_check
        %p269 = pneg %p268
      $region34: #{tpu_custom_call.1} parent=31 // pred_check_branch
        %271 = sbr.rel (%p269) target = $region36
      $region35: #{tpu_custom_call.1} parent=31 // pred_region
        %vm272 = vcmask 523264
        %273 = vst.msk [vmem:[#allocation2] sm:$0xff] %vm272, 0.0
        %274 = vst.msk [vmem:[#allocation2 + $0x8] sm:$0xff] %vm272, 0.0
        %275 = vst.msk [vmem:[#allocation2 + $0x10] sm:$0xff] %vm272, 0.0
        %276 = vst.msk [vmem:[#allocation2 + $0x18] sm:$0xff] %vm272, 0.0
        %277 = vst.msk [vmem:[#allocation2 + $0x20] sm:$0xff] %vm272, 0.0
        %278 = vst.msk [vmem:[#allocation2 + $0x28] sm:$0xff] %vm272, 0.0
        %279 = vst.msk [vmem:[#allocation2 + $0x30] sm:$0xff] %vm272, 0.0
        %280 = vst.msk [vmem:[#allocation2 + $0x38] sm:$0xff] %vm272, 0.0
        %281 = vst.msk [vmem:[#allocation2 + $0x40] sm:$0xff] %vm272, 0.0
        %282 = vst.msk [vmem:[#allocation2 + $0x48] sm:$0xff] %vm272, 0.0
        %283 = vst.msk [vmem:[#allocation2 + $0x50] sm:$0xff] %vm272, 0.0
        %284 = vst.msk [vmem:[#allocation2 + $0x58] sm:$0xff] %vm272, 0.0
        %285 = vst.msk [vmem:[#allocation2 + $0x60] sm:$0xff] %vm272, 0.0
        %286 = vst.msk [vmem:[#allocation2 + $0x68] sm:$0xff] %vm272, 0.0
        %287 = vst.msk [vmem:[#allocation2 + $0x70] sm:$0xff] %vm272, 0.0
        %288 = vst.msk [vmem:[#allocation2 + $0x78] sm:$0xff] %vm272, 0.0
        %289 = vst.msk [vmem:[#allocation2 + $0x80] sm:$0xff] %vm272, 0.0
        %290 = vst.msk [vmem:[#allocation2 + $0x88] sm:$0xff] %vm272, 0.0
        %291 = vst.msk [vmem:[#allocation2 + $0x90] sm:$0xff] %vm272, 0.0
        %292 = vst.msk [vmem:[#allocation2 + $0x98] sm:$0xff] %vm272, 0.0
        %293 = vst.msk [vmem:[#allocation2 + $0xa0] sm:$0xff] %vm272, 0.0
        %294 = vst.msk [vmem:[#allocation2 + $0xa8] sm:$0xff] %vm272, 0.0
        %295 = vst.msk [vmem:[#allocation2 + $0xb0] sm:$0xff] %vm272, 0.0
        %296 = vst.msk [vmem:[#allocation2 + $0xb8] sm:$0xff] %vm272, 0.0
        %297 = vst.msk [vmem:[#allocation2 + $0xc0] sm:$0xff] %vm272, 0.0
        %298 = vst.msk [vmem:[#allocation2 + $0xc8] sm:$0xff] %vm272, 0.0
        %299 = vst.msk [vmem:[#allocation2 + $0xd0] sm:$0xff] %vm272, 0.0
        %300 = vst.msk [vmem:[#allocation2 + $0xd8] sm:$0xff] %vm272, 0.0
        %301 = vst.msk [vmem:[#allocation2 + $0xe0] sm:$0xff] %vm272, 0.0
        %302 = vst.msk [vmem:[#allocation2 + $0xe8] sm:$0xff] %vm272, 0.0
        %303 = vst.msk [vmem:[#allocation2 + $0xf0] sm:$0xff] %vm272, 0.0
        %304 = vst.msk [vmem:[#allocation2 + $0xf8] sm:$0xff] %vm272, 0.0
        %305 = vst.msk [vmem:[#allocation2 + $0x100] sm:$0xff] %vm272, 0.0
        %306 = vst.msk [vmem:[#allocation2 + $0x108] sm:$0xff] %vm272, 0.0
        %307 = vst.msk [vmem:[#allocation2 + $0x110] sm:$0xff] %vm272, 0.0
        %308 = vst.msk [vmem:[#allocation2 + $0x118] sm:$0xff] %vm272, 0.0
        %309 = vst.msk [vmem:[#allocation2 + $0x120] sm:$0xff] %vm272, 0.0
        %310 = vst.msk [vmem:[#allocation2 + $0x128] sm:$0xff] %vm272, 0.0
        %311 = vst.msk [vmem:[#allocation2 + $0x130] sm:$0xff] %vm272, 0.0
        %312 = vst.msk [vmem:[#allocation2 + $0x138] sm:$0xff] %vm272, 0.0
        %313 = vst.msk [vmem:[#allocation2 + $0x140] sm:$0xff] %vm272, 0.0
        %314 = vst.msk [vmem:[#allocation2 + $0x148] sm:$0xff] %vm272, 0.0
        %315 = vst.msk [vmem:[#allocation2 + $0x150] sm:$0xff] %vm272, 0.0
        %316 = vst.msk [vmem:[#allocation2 + $0x158] sm:$0xff] %vm272, 0.0
        %317 = vst.msk [vmem:[#allocation2 + $0x160] sm:$0xff] %vm272, 0.0
        %318 = vst.msk [vmem:[#allocation2 + $0x168] sm:$0xff] %vm272, 0.0
        %319 = vst.msk [vmem:[#allocation2 + $0x170] sm:$0xff] %vm272, 0.0
        %320 = vst.msk [vmem:[#allocation2 + $0x178] sm:$0xff] %vm272, 0.0
        %321 = vst.msk [vmem:[#allocation2 + $0x180] sm:$0xff] %vm272, 0.0
        %322 = vst.msk [vmem:[#allocation2 + $0x188] sm:$0xff] %vm272, 0.0
        %323 = vst.msk [vmem:[#allocation2 + $0x190] sm:$0xff] %vm272, 0.0
        %324 = vst.msk [vmem:[#allocation2 + $0x198] sm:$0xff] %vm272, 0.0
        %325 = vst.msk [vmem:[#allocation2 + $0x1a0] sm:$0xff] %vm272, 0.0
        %326 = vst.msk [vmem:[#allocation2 + $0x1a8] sm:$0xff] %vm272, 0.0
        %327 = vst.msk [vmem:[#allocation2 + $0x1b0] sm:$0xff] %vm272, 0.0
        %328 = vst.msk [vmem:[#allocation2 + $0x1b8] sm:$0xff] %vm272, 0.0
        %329 = vst.msk [vmem:[#allocation2 + $0x1c0] sm:$0xff] %vm272, 0.0
        %330 = vst.msk [vmem:[#allocation2 + $0x1c8] sm:$0xff] %vm272, 0.0
        %331 = vst.msk [vmem:[#allocation2 + $0x1d0] sm:$0xff] %vm272, 0.0
        %332 = vst.msk [vmem:[#allocation2 + $0x1d8] sm:$0xff] %vm272, 0.0
        %333 = vst.msk [vmem:[#allocation2 + $0x1e0] sm:$0xff] %vm272, 0.0
        %334 = vst.msk [vmem:[#allocation2 + $0x1e8] sm:$0xff] %vm272, 0.0
        %335 = vst.msk [vmem:[#allocation2 + $0x1f0] sm:$0xff] %vm272, 0.0
        %336 = vst.msk [vmem:[#allocation2 + $0x1f8] sm:$0xff] %vm272, 0.0
      $region36: #{tpu_custom_call.1} parent=31 // pred_fallthru
        _
      %v337 = vld [vmem:[#allocation2] sm:$0xff]
      %v338 = vld [vmem:[#allocation2 + $0x8] sm:$0xff]
      %v339 = vld [vmem:[#allocation2 + $0x10] sm:$0xff]
      %v340 = vld [vmem:[#allocation2 + $0x18] sm:$0xff]
      %v341 = vld [vmem:[#allocation2 + $0x20] sm:$0xff]
      %v342 = vld [vmem:[#allocation2 + $0x28] sm:$0xff]
      %v343 = vld [vmem:[#allocation2 + $0x30] sm:$0xff]
      %v344 = vld [vmem:[#allocation2 + $0x38] sm:$0xff]
      %v345 = vld [vmem:[#allocation2 + $0x40] sm:$0xff]
      %v346 = vld [vmem:[#allocation2 + $0x48] sm:$0xff]
      %v347 = vld [vmem:[#allocation2 + $0x50] sm:$0xff]
      %v348 = vld [vmem:[#allocation2 + $0x58] sm:$0xff]
      %v349 = vld [vmem:[#allocation2 + $0x60] sm:$0xff]
      %v350 = vld [vmem:[#allocation2 + $0x68] sm:$0xff]
      %v351 = vld [vmem:[#allocation2 + $0x70] sm:$0xff]
      %v352 = vld [vmem:[#allocation2 + $0x78] sm:$0xff]
      %v353 = vld [vmem:[#allocation2 + $0x80] sm:$0xff]
      %v354 = vld [vmem:[#allocation2 + $0x88] sm:$0xff]
      %v355 = vld [vmem:[#allocation2 + $0x90] sm:$0xff]
      %v356 = vld [vmem:[#allocation2 + $0x98] sm:$0xff]
      %v357 = vld [vmem:[#allocation2 + $0xa0] sm:$0xff]
      %v358 = vld [vmem:[#allocation2 + $0xa8] sm:$0xff]
      %v359 = vld [vmem:[#allocation2 + $0xb0] sm:$0xff]
      %v360 = vld [vmem:[#allocation2 + $0xb8] sm:$0xff]
      %v361 = vld [vmem:[#allocation2 + $0xc0] sm:$0xff]
      %v362 = vld [vmem:[#allocation2 + $0xc8] sm:$0xff]
      %v363 = vld [vmem:[#allocation2 + $0xd0] sm:$0xff]
      %v364 = vld [vmem:[#allocation2 + $0xd8] sm:$0xff]
      %v365 = vld [vmem:[#allocation2 + $0xe0] sm:$0xff]
      %v366 = vld [vmem:[#allocation2 + $0xe8] sm:$0xff]
      %v367 = vld [vmem:[#allocation2 + $0xf0] sm:$0xff]
      %v368 = vld [vmem:[#allocation2 + $0xf8] sm:$0xff]
      %v369 = vld [vmem:[#allocation2 + $0x100] sm:$0xff]
      %v370 = vld [vmem:[#allocation2 + $0x108] sm:$0xff]
      %v371 = vld [vmem:[#allocation2 + $0x110] sm:$0xff]
      %v372 = vld [vmem:[#allocation2 + $0x118] sm:$0xff]
      %v373 = vld [vmem:[#allocation2 + $0x120] sm:$0xff]
      %v374 = vld [vmem:[#allocation2 + $0x128] sm:$0xff]
      %v375 = vld [vmem:[#allocation2 + $0x130] sm:$0xff]
      %v376 = vld [vmem:[#allocation2 + $0x138] sm:$0xff]
      %v377 = vld [vmem:[#allocation2 + $0x140] sm:$0xff]
      %v378 = vld [vmem:[#allocation2 + $0x148] sm:$0xff]
      %v379 = vld [vmem:[#allocation2 + $0x150] sm:$0xff]
      %v380 = vld [vmem:[#allocation2 + $0x158] sm:$0xff]
      %v381 = vld [vmem:[#allocation2 + $0x160] sm:$0xff]
      %v382 = vld [vmem:[#allocation2 + $0x168] sm:$0xff]
      %v383 = vld [vmem:[#allocation2 + $0x170] sm:$0xff]
      %v384 = vld [vmem:[#allocation2 + $0x178] sm:$0xff]
      %v385 = vld [vmem:[#allocation2 + $0x180] sm:$0xff]
      %v386 = vld [vmem:[#allocation2 + $0x188] sm:$0xff]
      %v387 = vld [vmem:[#allocation2 + $0x190] sm:$0xff]
      %v388 = vld [vmem:[#allocation2 + $0x198] sm:$0xff]
      %v389 = vld [vmem:[#allocation2 + $0x1a0] sm:$0xff]
      %v390 = vld [vmem:[#allocation2 + $0x1a8] sm:$0xff]
      %v391 = vld [vmem:[#allocation2 + $0x1b0] sm:$0xff]
      %v392 = vld [vmem:[#allocation2 + $0x1b8] sm:$0xff]
      %v393 = vld [vmem:[#allocation2 + $0x1c0] sm:$0xff]
      %v394 = vld [vmem:[#allocation2 + $0x1c8] sm:$0xff]
      %v395 = vld [vmem:[#allocation2 + $0x1d0] sm:$0xff]
      %v396 = vld [vmem:[#allocation2 + $0x1d8] sm:$0xff]
      %v397 = vld [vmem:[#allocation2 + $0x1e0] sm:$0xff]
      %v398 = vld [vmem:[#allocation2 + $0x1e8] sm:$0xff]
      %v399 = vld [vmem:[#allocation2 + $0x1f0] sm:$0xff]
      %v400 = vld [vmem:[#allocation2 + $0x1f8] sm:$0xff]
      %v401 = vld [vmem:[%s243] sm:$0xff]
      %v402 = vld [vmem:[%s243 + $0x8] sm:$0xff]
      %v403 = vld [vmem:[%s243 + $0x10] sm:$0xff]
      %v404 = vld [vmem:[%s243 + $0x18] sm:$0xff]
      %v405 = vld [vmem:[%s243 + $0x20] sm:$0xff]
      %v406 = vld [vmem:[%s243 + $0x28] sm:$0xff]
      %v407 = vld [vmem:[%s243 + $0x30] sm:$0xff]
      %v408 = vld [vmem:[%s243 + $0x38] sm:$0xff]
      %v409 = vld [vmem:[%s243 + $0x40] sm:$0xff]
      %v410 = vld [vmem:[%s243 + $0x48] sm:$0xff]
      %v411 = vld [vmem:[%s243 + $0x50] sm:$0xff]
      %v412 = vld [vmem:[%s243 + $0x58] sm:$0xff]
      %v413 = vld [vmem:[%s243 + $0x60] sm:$0xff]
      %v414 = vld [vmem:[%s243 + $0x68] sm:$0xff]
      %v415 = vld [vmem:[%s243 + $0x70] sm:$0xff]
      %v416 = vld [vmem:[%s243 + $0x78] sm:$0xff]
      %v417 = vld [vmem:[%s243 + $0x80] sm:$0xff]
      %v418 = vld [vmem:[%s243 + $0x88] sm:$0xff]
      %v419 = vld [vmem:[%s243 + $0x90] sm:$0xff]
      %v420 = vld [vmem:[%s243 + $0x98] sm:$0xff]
      %v421 = vld [vmem:[%s243 + $0xa0] sm:$0xff]
      %v422 = vld [vmem:[%s243 + $0xa8] sm:$0xff]
      %v423 = vld [vmem:[%s243 + $0xb0] sm:$0xff]
      %v424 = vld [vmem:[%s243 + $0xb8] sm:$0xff]
      %v425 = vld [vmem:[%s243 + $0xc0] sm:$0xff]
      %v426 = vld [vmem:[%s243 + $0xc8] sm:$0xff]
      %v427 = vld [vmem:[%s243 + $0xd0] sm:$0xff]
      %v428 = vld [vmem:[%s243 + $0xd8] sm:$0xff]
      %v429 = vld [vmem:[%s243 + $0xe0] sm:$0xff]
      %v430 = vld [vmem:[%s243 + $0xe8] sm:$0xff]
      %v431 = vld [vmem:[%s243 + $0xf0] sm:$0xff]
      %v432 = vld [vmem:[%s243 + $0xf8] sm:$0xff]
      %v433 = vld [vmem:[%s243 + $0x100] sm:$0xff]
      %v434 = vld [vmem:[%s243 + $0x108] sm:$0xff]
      %v435 = vld [vmem:[%s243 + $0x110] sm:$0xff]
      %v436 = vld [vmem:[%s243 + $0x118] sm:$0xff]
      %v437 = vld [vmem:[%s243 + $0x120] sm:$0xff]
      %v438 = vld [vmem:[%s243 + $0x128] sm:$0xff]
      %v439 = vld [vmem:[%s243 + $0x130] sm:$0xff]
      %v440 = vld [vmem:[%s243 + $0x138] sm:$0xff]
      %v441 = vld [vmem:[%s243 + $0x140] sm:$0xff]
      %v442 = vld [vmem:[%s243 + $0x148] sm:$0xff]
      %v443 = vld [vmem:[%s243 + $0x150] sm:$0xff]
      %v444 = vld [vmem:[%s243 + $0x158] sm:$0xff]
      %v445 = vld [vmem:[%s243 + $0x160] sm:$0xff]
      %v446 = vld [vmem:[%s243 + $0x168] sm:$0xff]
      %v447 = vld [vmem:[%s243 + $0x170] sm:$0xff]
      %v448 = vld [vmem:[%s243 + $0x178] sm:$0xff]
      %v449 = vld [vmem:[%s243 + $0x180] sm:$0xff]
      %v450 = vld [vmem:[%s243 + $0x188] sm:$0xff]
      %v451 = vld [vmem:[%s243 + $0x190] sm:$0xff]
      %v452 = vld [vmem:[%s243 + $0x198] sm:$0xff]
      %v453 = vld [vmem:[%s243 + $0x1a0] sm:$0xff]
      %v454 = vld [vmem:[%s243 + $0x1a8] sm:$0xff]
      %v455 = vld [vmem:[%s243 + $0x1b0] sm:$0xff]
      %v456 = vld [vmem:[%s243 + $0x1b8] sm:$0xff]
      %v457 = vld [vmem:[%s243 + $0x1c0] sm:$0xff]
      %v458 = vld [vmem:[%s243 + $0x1c8] sm:$0xff]
      %v459 = vld [vmem:[%s243 + $0x1d0] sm:$0xff]
      %v460 = vld [vmem:[%s243 + $0x1d8] sm:$0xff]
      %v461 = vld [vmem:[%s243 + $0x1e0] sm:$0xff]
      %v462 = vld [vmem:[%s243 + $0x1e8] sm:$0xff]
      %v463 = vld [vmem:[%s243 + $0x1f0] sm:$0xff]
      %v464 = vld [vmem:[%s243 + $0x1f8] sm:$0xff]
      %v465 = vld [vmem:[%s253] sm:$0xf]
      %v466 = vld [vmem:[%s253 + $0x4] sm:$0xf]
      %v467 = vld [vmem:[%s253 + $0x8] sm:$0xf]
      %v468 = vld [vmem:[%s253 + $0xc] sm:$0xf]
      %v469 = vld [vmem:[%s253 + $0x10] sm:$0xf]
      %v470 = vld [vmem:[%s253 + $0x14] sm:$0xf]
      %v471 = vld [vmem:[%s253 + $0x18] sm:$0xf]
      %v472 = vld [vmem:[%s253 + $0x1c] sm:$0xf]
      %v473 = vld [vmem:[%s253 + $0x20] sm:$0xf]
      %v474 = vld [vmem:[%s253 + $0x24] sm:$0xf]
      %v475 = vld [vmem:[%s253 + $0x28] sm:$0xf]
      %v476 = vld [vmem:[%s253 + $0x2c] sm:$0xf]
      %v477 = vld [vmem:[%s253 + $0x30] sm:$0xf]
      %v478 = vld [vmem:[%s253 + $0x34] sm:$0xf]
      %v479 = vld [vmem:[%s253 + $0x38] sm:$0xf]
      %v480 = vld [vmem:[%s253 + $0x3c] sm:$0xf]
      %v481 = vld [vmem:[%s253 + $0x40] sm:$0xf]
      %v482 = vld [vmem:[%s253 + $0x44] sm:$0xf]
      %v483 = vld [vmem:[%s253 + $0x48] sm:$0x3]
      %v548 = vunpack.c.l.b16 %v401
      %v549 = vunpack.c.h.b16 %v401
      %v550 = vunpack.c.l.b16 %v402
      %v551 = vunpack.c.h.b16 %v402
      %v552 = vunpack.c.l.b16 %v403
      %v553 = vunpack.c.h.b16 %v403
      %v554 = vunpack.c.l.b16 %v404
      %v555 = vunpack.c.h.b16 %v404
      %v556 = vunpack.c.l.b16 %v405
      %v557 = vunpack.c.h.b16 %v405
      %v558 = vunpack.c.l.b16 %v406
      %v559 = vunpack.c.h.b16 %v406
      %v560 = vunpack.c.l.b16 %v407
      %v561 = vunpack.c.h.b16 %v407
      %v562 = vunpack.c.l.b16 %v408
      %v563 = vunpack.c.h.b16 %v408
      %v564 = vunpack.c.l.b16 %v409
      %v565 = vunpack.c.h.b16 %v409
      %v566 = vunpack.c.l.b16 %v410
      %v567 = vunpack.c.h.b16 %v410
      %v568 = vunpack.c.l.b16 %v411
      %v569 = vunpack.c.h.b16 %v411
      %v570 = vunpack.c.l.b16 %v412
      %v571 = vunpack.c.h.b16 %v412
      %v572 = vunpack.c.l.b16 %v413
      %v573 = vunpack.c.h.b16 %v413
      %v574 = vunpack.c.l.b16 %v414
      %v575 = vunpack.c.h.b16 %v414
      %v576 = vunpack.c.l.b16 %v415
      %v577 = vunpack.c.h.b16 %v415
      %v578 = vunpack.c.l.b16 %v416
      %v579 = vunpack.c.h.b16 %v416
      %v580 = vunpack.c.l.b16 %v417
      %v581 = vunpack.c.h.b16 %v417
      %v582 = vunpack.c.l.b16 %v418
      %v583 = vunpack.c.h.b16 %v418
      %v584 = vunpack.c.l.b16 %v419
      %v585 = vunpack.c.h.b16 %v419
      %v586 = vunpack.c.l.b16 %v420
      %v587 = vunpack.c.h.b16 %v420
      %v588 = vunpack.c.l.b16 %v421
      %v589 = vunpack.c.h.b16 %v421
      %v590 = vunpack.c.l.b16 %v422
      %v591 = vunpack.c.h.b16 %v422
      %v592 = vunpack.c.l.b16 %v423
      %v593 = vunpack.c.h.b16 %v423
      %v594 = vunpack.c.l.b16 %v424
      %v595 = vunpack.c.h.b16 %v424
      %v596 = vunpack.c.l.b16 %v425
      %v597 = vunpack.c.h.b16 %v425
      %v598 = vunpack.c.l.b16 %v426
      %v599 = vunpack.c.h.b16 %v426
      %v600 = vunpack.c.l.b16 %v427
      %v601 = vunpack.c.h.b16 %v427
      %v602 = vunpack.c.l.b16 %v428
      %v603 = vunpack.c.h.b16 %v428
      %v604 = vunpack.c.l.b16 %v429
      %v605 = vunpack.c.h.b16 %v429
      %v606 = vunpack.c.l.b16 %v430
      %v607 = vunpack.c.h.b16 %v430
      %v608 = vunpack.c.l.b16 %v431
      %v609 = vunpack.c.h.b16 %v431
      %v610 = vunpack.c.l.b16 %v432
      %v611 = vunpack.c.h.b16 %v432
      %v612 = vunpack.c.l.b16 %v433
      %v613 = vunpack.c.h.b16 %v433
      %v614 = vunpack.c.l.b16 %v434
      %v615 = vunpack.c.h.b16 %v434
      %v616 = vunpack.c.l.b16 %v435
      %v617 = vunpack.c.h.b16 %v435
      %v618 = vunpack.c.l.b16 %v436
      %v619 = vunpack.c.h.b16 %v436
      %v620 = vunpack.c.l.b16 %v437
      %v621 = vunpack.c.h.b16 %v437
      %v622 = vunpack.c.l.b16 %v438
      %v623 = vunpack.c.h.b16 %v438
      %v624 = vunpack.c.l.b16 %v439
      %v625 = vunpack.c.h.b16 %v439
      %v626 = vunpack.c.l.b16 %v440
      %v627 = vunpack.c.h.b16 %v440
      %v628 = vunpack.c.l.b16 %v441
      %v629 = vunpack.c.h.b16 %v441
      %v630 = vunpack.c.l.b16 %v442
      %v631 = vunpack.c.h.b16 %v442
      %v632 = vunpack.c.l.b16 %v443
      %v633 = vunpack.c.h.b16 %v443
      %v634 = vunpack.c.l.b16 %v444
      %v635 = vunpack.c.h.b16 %v444
      %v636 = vunpack.c.l.b16 %v445
      %v637 = vunpack.c.h.b16 %v445
      %v638 = vunpack.c.l.b16 %v446
      %v639 = vunpack.c.h.b16 %v446
      %v640 = vunpack.c.l.b16 %v447
      %v641 = vunpack.c.h.b16 %v447
      %v642 = vunpack.c.l.b16 %v448
      %v643 = vunpack.c.h.b16 %v448
      %v644 = vunpack.c.l.b16 %v449
      %v645 = vunpack.c.h.b16 %v449
      %v646 = vunpack.c.l.b16 %v450
      %v647 = vunpack.c.h.b16 %v450
      %v648 = vunpack.c.l.b16 %v451
      %v649 = vunpack.c.h.b16 %v451
      %v650 = vunpack.c.l.b16 %v452
      %v651 = vunpack.c.h.b16 %v452
      %v652 = vunpack.c.l.b16 %v453
      %v653 = vunpack.c.h.b16 %v453
      %v654 = vunpack.c.l.b16 %v454
      %v655 = vunpack.c.h.b16 %v454
      %v656 = vunpack.c.l.b16 %v455
      %v657 = vunpack.c.h.b16 %v455
      %v658 = vunpack.c.l.b16 %v456
      %v659 = vunpack.c.h.b16 %v456
      %v660 = vunpack.c.l.b16 %v457
      %v661 = vunpack.c.h.b16 %v457
      %v662 = vunpack.c.l.b16 %v458
      %v663 = vunpack.c.h.b16 %v458
      %v664 = vunpack.c.l.b16 %v459
      %v665 = vunpack.c.h.b16 %v459
      %v666 = vunpack.c.l.b16 %v460
      %v667 = vunpack.c.h.b16 %v460
      %v668 = vunpack.c.l.b16 %v461
      %v669 = vunpack.c.h.b16 %v461
      %v670 = vunpack.c.l.b16 %v462
      %v671 = vunpack.c.h.b16 %v462
      %v672 = vunpack.c.l.b16 %v463
      %v673 = vunpack.c.h.b16 %v463
      %v674 = vunpack.c.l.b16 %v464
      %v675 = vunpack.c.h.b16 %v464
      %v676 = vpack.c.b16 %v550, %v548
      %v677 = vpack.c.b16 %v551, %v549
      %v678 = vpack.c.b16 %v554, %v552
      %v679 = vpack.c.b16 %v555, %v553
      %v680 = vpack.c.b16 %v558, %v556
      %v681 = vpack.c.b16 %v559, %v557
      %v682 = vpack.c.b16 %v562, %v560
      %v683 = vpack.c.b16 %v563, %v561
      %v684 = vpack.c.b16 %v566, %v564
      %v685 = vpack.c.b16 %v567, %v565
      %v686 = vpack.c.b16 %v570, %v568
      %v687 = vpack.c.b16 %v571, %v569
      %v688 = vpack.c.b16 %v574, %v572
      %v689 = vpack.c.b16 %v575, %v573
      %v690 = vpack.c.b16 %v578, %v576
      %v691 = vpack.c.b16 %v579, %v577
      %v692 = vpack.c.b16 %v582, %v580
      %v693 = vpack.c.b16 %v583, %v581
      %v694 = vpack.c.b16 %v586, %v584
      %v695 = vpack.c.b16 %v587, %v585
      %v696 = vpack.c.b16 %v590, %v588
      %v697 = vpack.c.b16 %v591, %v589
      %v698 = vpack.c.b16 %v594, %v592
      %v699 = vpack.c.b16 %v595, %v593
      %v700 = vpack.c.b16 %v598, %v596
      %v701 = vpack.c.b16 %v599, %v597
      %v702 = vpack.c.b16 %v602, %v600
      %v703 = vpack.c.b16 %v603, %v601
      %v704 = vpack.c.b16 %v606, %v604
      %v705 = vpack.c.b16 %v607, %v605
      %v706 = vpack.c.b16 %v610, %v608
      %v707 = vpack.c.b16 %v611, %v609
      %v708 = vpack.c.b16 %v614, %v612
      %v709 = vpack.c.b16 %v615, %v613
      %v710 = vpack.c.b16 %v618, %v616
      %v711 = vpack.c.b16 %v619, %v617
      %v712 = vpack.c.b16 %v622, %v620
      %v713 = vpack.c.b16 %v623, %v621
      %v714 = vpack.c.b16 %v626, %v624
      %v715 = vpack.c.b16 %v627, %v625
      %v716 = vpack.c.b16 %v630, %v628
      %v717 = vpack.c.b16 %v631, %v629
      %v718 = vpack.c.b16 %v634, %v632
      %v719 = vpack.c.b16 %v635, %v633
      %v720 = vpack.c.b16 %v638, %v636
      %v721 = vpack.c.b16 %v639, %v637
      %v722 = vpack.c.b16 %v642, %v640
      %v723 = vpack.c.b16 %v643, %v641
      %v724 = vpack.c.b16 %v646, %v644
      %v725 = vpack.c.b16 %v647, %v645
      %v726 = vpack.c.b16 %v650, %v648
      %v727 = vpack.c.b16 %v651, %v649
      %v728 = vpack.c.b16 %v654, %v652
      %v729 = vpack.c.b16 %v655, %v653
      %v730 = vpack.c.b16 %v658, %v656
      %v731 = vpack.c.b16 %v659, %v657
      %v732 = vpack.c.b16 %v662, %v660
      %v733 = vpack.c.b16 %v663, %v661
      %v734 = vpack.c.b16 %v666, %v664
      %v735 = vpack.c.b16 %v667, %v665
      %v736 = vpack.c.b16 %v670, %v668
      %v737 = vpack.c.b16 %v671, %v669
      %v738 = vpack.c.b16 %v674, %v672
      %v739 = vpack.c.b16 %v675, %v673
      %v791 = vunpack.c.l.b16 %v465
      %v792 = vunpack.c.l.b16 %v466
      %v793 = vunpack.c.l.b16 %v467
      %v794 = vunpack.c.l.b16 %v468
      %v795 = vunpack.c.l.b16 %v469
      %v796 = vunpack.c.l.b16 %v470
      %v797 = vunpack.c.l.b16 %v471
      %v798 = vunpack.c.l.b16 %v472
      %v799 = vunpack.c.l.b16 %v473
      %v800 = vunpack.c.l.b16 %v474
      %v801 = vunpack.c.l.b16 %v475
      %v802 = vunpack.c.l.b16 %v476
      %v803 = vunpack.c.l.b16 %v477
      %v804 = vunpack.c.l.b16 %v478
      %v805 = vunpack.c.l.b16 %v479
      %v806 = vunpack.c.l.b16 %v480
      %v807 = vunpack.c.l.b16 %v481
      %v808 = vunpack.c.l.b16 %v482
      %v809 = vunpack.c.l.b16 %v483
      %v810 = vpack.c.b16 %v792, %v791
      %v811 = vpack.c.b16 %v794, %v793
      %v812 = vpack.c.b16 %v796, %v795
      %v813 = vpack.c.b16 %v798, %v797
      %v814 = vpack.c.b16 %v800, %v799
      %v815 = vpack.c.b16 %v802, %v801
      %v816 = vpack.c.b16 %v804, %v803
      %v817 = vpack.c.b16 %v806, %v805
      %v818 = vpack.c.b16 %v808, %v807
      %v819 = vpack.c.b16 %v809, %v809
      %vm829 = vcmask 154624
      %v831 = vsel %vm829, %v677, 0
      %v834 = vsel %vm829, %v679, 0
      %v837 = vsel %vm829, %v681, 0
      %v840 = vsel %vm829, %v683, 0
      %v843 = vsel %vm829, %v685, 0
      %v846 = vsel %vm829, %v687, 0
      %v849 = vsel %vm829, %v689, 0
      %v852 = vsel %vm829, %v691, 0
      %v855 = vsel %vm829, %v693, 0
      %v858 = vsel %vm829, %v695, 0
      %v861 = vsel %vm829, %v697, 0
      %v864 = vsel %vm829, %v699, 0
      %v867 = vsel %vm829, %v701, 0
      %v870 = vsel %vm829, %v703, 0
      %v873 = vsel %vm829, %v705, 0
      %v876 = vsel %vm829, %v707, 0
      %v879 = vsel %vm829, %v709, 0
      %v882 = vsel %vm829, %v711, 0
      %v885 = vsel %vm829, %v713, 0
      %v888 = vsel %vm829, %v715, 0
      %v891 = vsel %vm829, %v717, 0
      %v894 = vsel %vm829, %v719, 0
      %v897 = vsel %vm829, %v721, 0
      %v900 = vsel %vm829, %v723, 0
      %v903 = vsel %vm829, %v725, 0
      %v906 = vsel %vm829, %v727, 0
      %v909 = vsel %vm829, %v729, 0
      %v912 = vsel %vm829, %v731, 0
      %v915 = vsel %vm829, %v733, 0
      %v918 = vsel %vm829, %v735, 0
      %v921 = vsel %vm829, %v737, 0
      %v924 = vsel %vm829, %v739, 0
      %vm926 = vcmask 1040384
      %vm927 = vcmask 1041408
      %v928 = vsel %vm926, 4294967295, 65535
      %v929 = vsel %vm927, %v928, 0
      %v931 = vand.u32 %v819, %v929
      %933 = vmatprep.subr.bf16.mxu0 0
      %934 = vmatpush1.bf16.msra.mxu0 %v810
      %935 = vmatprep.subr.bf16.mxu0 0
      %936 = vmatpush1.bf16.msra.mxu0 %v811
      %937 = vmatprep.subr.bf16.mxu0 0
      %938 = vmatpush1.bf16.msra.mxu0 %v812
      %939 = vmatprep.subr.bf16.mxu0 0
      %940 = vmatpush1.bf16.msra.mxu0 %v813
      %941 = vmatprep.subr.bf16.mxu0 0
      %942 = vmatpush1.bf16.msra.mxu0 %v814
      %943 = vmatprep.subr.bf16.mxu0 0
      %944 = vmatpush1.bf16.msra.mxu0 %v815
      %945 = vmatprep.subr.bf16.mxu0 0
      %946 = vmatpush1.bf16.msra.mxu0 %v816
      %947 = vmatprep.subr.bf16.mxu0 0
      %948 = vmatpush1.bf16.msra.mxu0 %v817
      %949 = vmatprep.subr.bf16.mxu0 0
      %950 = vmatpush1.bf16.msra.mxu0 %v818
      %951 = vmatprep.subr.bf16.mxu0 0
      %952 = vmatpush1.bf16.msra.mxu0 %v931
      %953 = vmatprep.subr.bf16.mxu0 0
      %954 = vmatpush1.bf16.msra.mxu0 0
      %955 = vmatprep.subr.bf16.mxu0 0
      %956 = vmatpush1.bf16.msra.mxu0 0
      %957 = vmatprep.subr.bf16.mxu0 0
      %958 = vmatpush1.bf16.msra.mxu0 0
      %959 = vmatprep.subr.bf16.mxu0 0
      %960 = vmatpush1.bf16.msra.mxu0 0
      %961 = vmatprep.subr.bf16.mxu0 0
      %962 = vmatpush1.bf16.msra.mxu0 0
      %963 = vmatprep.subr.bf16.mxu0 0
      %964 = vmatpush1.bf16.msra.mxu0 0
      %965 = vmatprep.mubr.bf16.mxu0 %v831
      %966 = vmatmul.mubr.bf16.gmra.mrb[0].mxu0 %v676
      %v967 = vpop.f32.mrb[0].mxu0
      %v968 = vadd.f32 0.0, %v967
      %v969 = vpop.f32.mrb[0].mxu0
      %v970 = vpop.f32.mrb[0].mxu0
      %v971 = vadd.f32 0.0, %v970
      %v972 = vpop.f32.mrb[0].mxu0
      %973 = vmatprep.mubr.bf16.mxu0 %v834
      %974 = vmatmul.mubr.bf16.gmra.mrb[0].mxu0 %v678
      %v975 = vpop.f32.mrb[0].mxu0
      %v976 = vadd.f32 0.0, %v975
      %v977 = vpop.f32.mrb[0].mxu0
      %v978 = vpop.f32.mrb[0].mxu0
      %v979 = vadd.f32 0.0, %v978
      %v980 = vpop.f32.mrb[0].mxu0
      %981 = vmatprep.mubr.bf16.mxu0 %v837
      %982 = vmatmul.mubr.bf16.gmra.mrb[0].mxu0 %v680
      %v983 = vpop.f32.mrb[0].mxu0
      %v984 = vadd.f32 0.0, %v983
      %v985 = vpop.f32.mrb[0].mxu0
      %v986 = vpop.f32.mrb[0].mxu0
      %v987 = vadd.f32 0.0, %v986
      %v988 = vpop.f32.mrb[0].mxu0
      %989 = vmatprep.mubr.bf16.mxu0 %v840
      %990 = vmatmul.mubr.bf16.gmra.mrb[0].mxu0 %v682
      %v991 = vpop.f32.mrb[0].mxu0
      %v992 = vadd.f32 0.0, %v991
      %v993 = vpop.f32.mrb[0].mxu0
      %v994 = vpop.f32.mrb[0].mxu0
      %v995 = vadd.f32 0.0, %v994
      %v996 = vpop.f32.mrb[0].mxu0
      %997 = vmatprep.mubr.bf16.mxu0 %v843
      %998 = vmatmul.mubr.bf16.gmra.mrb[0].mxu0 %v684
      %v999 = vpop.f32.mrb[0].mxu0
      %v1000 = vadd.f32 0.0, %v999
      %v1001 = vpop.f32.mrb[0].mxu0
      %v1002 = vpop.f32.mrb[0].mxu0
      %v1003 = vadd.f32 0.0, %v1002
      %v1004 = vpop.f32.mrb[0].mxu0
      %1005 = vmatprep.mubr.bf16.mxu0 %v846
      %1006 = vmatmul.mubr.bf16.gmra.mrb[0].mxu0 %v686
      %v1007 = vpop.f32.mrb[0].mxu0
      %v1008 = vadd.f32 0.0, %v1007
      %v1009 = vpop.f32.mrb[0].mxu0
      %v1010 = vpop.f32.mrb[0].mxu0
      %v1011 = vadd.f32 0.0, %v1010
      %v1012 = vpop.f32.mrb[0].mxu0
      %1013 = vmatprep.mubr.bf16.mxu0 %v849
      %1014 = vmatmul.mubr.bf16.gmra.mrb[0].mxu0 %v688
      %v1015 = vpop.f32.mrb[0].mxu0
      %v1016 = vadd.f32 0.0, %v1015
      %v1017 = vpop.f32.mrb[0].mxu0
      %v1018 = vpop.f32.mrb[0].mxu0
      %v1019 = vadd.f32 0.0, %v1018
      %v1020 = vpop.f32.mrb[0].mxu0
      %1021 = vmatprep.mubr.bf16.mxu0 %v852
      %1022 = vmatmul.mubr.bf16.gmra.mrb[0].mxu0 %v690
      %v1023 = vpop.f32.mrb[0].mxu0
      %v1024 = vadd.f32 0.0, %v1023
      %v1025 = vpop.f32.mrb[0].mxu0
      %v1026 = vpop.f32.mrb[0].mxu0
      %v1027 = vadd.f32 0.0, %v1026
      %v1028 = vpop.f32.mrb[0].mxu0
      %1029 = vmatprep.mubr.bf16.mxu0 %v855
      %1030 = vmatmul.mubr.bf16.gmra.mrb[0].mxu0 %v692
      %v1031 = vpop.f32.mrb[0].mxu0
      %v1032 = vadd.f32 0.0, %v1031
      %v1033 = vpop.f32.mrb[0].mxu0
      %v1034 = vpop.f32.mrb[0].mxu0
      %v1035 = vadd.f32 0.0, %v1034
      %v1036 = vpop.f32.mrb[0].mxu0
      %1037 = vmatprep.mubr.bf16.mxu0 %v858
      %1038 = vmatmul.mubr.bf16.gmra.mrb[0].mxu0 %v694
      %v1039 = vpop.f32.mrb[0].mxu0
      %v1040 = vadd.f32 0.0, %v1039
      %v1041 = vpop.f32.mrb[0].mxu0
      %v1042 = vpop.f32.mrb[0].mxu0
      %v1043 = vadd.f32 0.0, %v1042
      %v1044 = vpop.f32.mrb[0].mxu0
      %1045 = vmatprep.mubr.bf16.mxu0 %v861
      %1046 = vmatmul.mubr.bf16.gmra.mrb[0].mxu0 %v696
      %v1047 = vpop.f32.mrb[0].mxu0
      %v1048 = vadd.f32 0.0, %v1047
      %v1049 = vpop.f32.mrb[0].mxu0
      %v1050 = vpop.f32.mrb[0].mxu0
      %v1051 = vadd.f32 0.0, %v1050
      %v1052 = vpop.f32.mrb[0].mxu0
      %1053 = vmatprep.mubr.bf16.mxu0 %v864
      %1054 = vmatmul.mubr.bf16.gmra.mrb[0].mxu0 %v698
      %v1055 = vpop.f32.mrb[0].mxu0
      %v1056 = vadd.f32 0.0, %v1055
      %v1057 = vpop.f32.mrb[0].mxu0
      %v1058 = vpop.f32.mrb[0].mxu0
      %v1059 = vadd.f32 0.0, %v1058
      %v1060 = vpop.f32.mrb[0].mxu0
      %1061 = vmatprep.mubr.bf16.mxu0 %v867
      %1062 = vmatmul.mubr.bf16.gmra.mrb[0].mxu0 %v700
      %v1063 = vpop.f32.mrb[0].mxu0
      %v1064 = vadd.f32 0.0, %v1063
      %v1065 = vpop.f32.mrb[0].mxu0
      %v1066 = vpop.f32.mrb[0].mxu0
      %v1067 = vadd.f32 0.0, %v1066
      %v1068 = vpop.f32.mrb[0].mxu0
      %1069 = vmatprep.mubr.bf16.mxu0 %v870
      %1070 = vmatmul.mubr.bf16.gmra.mrb[0].mxu0 %v702
      %v1071 = vpop.f32.mrb[0].mxu0
      %v1072 = vadd.f32 0.0, %v1071
      %v1073 = vpop.f32.mrb[0].mxu0
      %v1074 = vpop.f32.mrb[0].mxu0
      %v1075 = vadd.f32 0.0, %v1074
      %v1076 = vpop.f32.mrb[0].mxu0
      %1077 = vmatprep.mubr.bf16.mxu0 %v873
      %1078 = vmatmul.mubr.bf16.gmra.mrb[0].mxu0 %v704
      %v1079 = vpop.f32.mrb[0].mxu0
      %v1080 = vadd.f32 0.0, %v1079
      %v1081 = vpop.f32.mrb[0].mxu0
      %v1082 = vpop.f32.mrb[0].mxu0
      %v1083 = vadd.f32 0.0, %v1082
      %v1084 = vpop.f32.mrb[0].mxu0
      %1085 = vmatprep.mubr.bf16.mxu0 %v876
      %1086 = vmatmul.mubr.bf16.gmra.mrb[0].mxu0 %v706
      %v1087 = vpop.f32.mrb[0].mxu0
      %v1088 = vadd.f32 0.0, %v1087
      %v1089 = vpop.f32.mrb[0].mxu0
      %v1090 = vpop.f32.mrb[0].mxu0
      %v1091 = vadd.f32 0.0, %v1090
      %v1092 = vpop.f32.mrb[0].mxu0
      %1093 = vmatprep.mubr.bf16.mxu0 %v879
      %1094 = vmatmul.mubr.bf16.gmra.mrb[0].mxu0 %v708
      %v1095 = vpop.f32.mrb[0].mxu0
      %v1096 = vadd.f32 0.0, %v1095
      %v1097 = vpop.f32.mrb[0].mxu0
      %v1098 = vpop.f32.mrb[0].mxu0
      %v1099 = vadd.f32 0.0, %v1098
      %v1100 = vpop.f32.mrb[0].mxu0
      %1101 = vmatprep.mubr.bf16.mxu0 %v882
      %1102 = vmatmul.mubr.bf16.gmra.mrb[0].mxu0 %v710
      %v1103 = vpop.f32.mrb[0].mxu0
      %v1104 = vadd.f32 0.0, %v1103
      %v1105 = vpop.f32.mrb[0].mxu0
      %v1106 = vpop.f32.mrb[0].mxu0
      %v1107 = vadd.f32 0.0, %v1106
      %v1108 = vpop.f32.mrb[0].mxu0
      %1109 = vmatprep.mubr.bf16.mxu0 %v885
      %1110 = vmatmul.mubr.bf16.gmra.mrb[0].mxu0 %v712
      %v1111 = vpop.f32.mrb[0].mxu0
      %v1112 = vadd.f32 0.0, %v1111
      %v1113 = vpop.f32.mrb[0].mxu0
      %v1114 = vpop.f32.mrb[0].mxu0
      %v1115 = vadd.f32 0.0, %v1114
      %v1116 = vpop.f32.mrb[0].mxu0
      %1117 = vmatprep.mubr.bf16.mxu0 %v888
      %1118 = vmatmul.mubr.bf16.gmra.mrb[0].mxu0 %v714
      %v1119 = vpop.f32.mrb[0].mxu0
      %v1120 = vadd.f32 0.0, %v1119
      %v1121 = vpop.f32.mrb[0].mxu0
      %v1122 = vpop.f32.mrb[0].mxu0
      %v1123 = vadd.f32 0.0, %v1122
      %v1124 = vpop.f32.mrb[0].mxu0
      %1125 = vmatprep.mubr.bf16.mxu0 %v891
      %1126 = vmatmul.mubr.bf16.gmra.mrb[0].mxu0 %v716
      %v1127 = vpop.f32.mrb[0].mxu0
      %v1128 = vadd.f32 0.0, %v1127
      %v1129 = vpop.f32.mrb[0].mxu0
      %v1130 = vpop.f32.mrb[0].mxu0
      %v1131 = vadd.f32 0.0, %v1130
      %v1132 = vpop.f32.mrb[0].mxu0
      %1133 = vmatprep.mubr.bf16.mxu0 %v894
      %1134 = vmatmul.mubr.bf16.gmra.mrb[0].mxu0 %v718
      %v1135 = vpop.f32.mrb[0].mxu0
      %v1136 = vadd.f32 0.0, %v1135
      %v1137 = vpop.f32.mrb[0].mxu0
      %v1138 = vpop.f32.mrb[0].mxu0
      %v1139 = vadd.f32 0.0, %v1138
      %v1140 = vpop.f32.mrb[0].mxu0
      %1141 = vmatprep.mubr.bf16.mxu0 %v897
      %1142 = vmatmul.mubr.bf16.gmra.mrb[0].mxu0 %v720
      %v1143 = vpop.f32.mrb[0].mxu0
      %v1144 = vadd.f32 0.0, %v1143
      %v1145 = vpop.f32.mrb[0].mxu0
      %v1146 = vpop.f32.mrb[0].mxu0
      %v1147 = vadd.f32 0.0, %v1146
      %v1148 = vpop.f32.mrb[0].mxu0
      %1149 = vmatprep.mubr.bf16.mxu0 %v900
      %1150 = vmatmul.mubr.bf16.gmra.mrb[0].mxu0 %v722
      %v1151 = vpop.f32.mrb[0].mxu0
      %v1152 = vadd.f32 0.0, %v1151
      %v1153 = vpop.f32.mrb[0].mxu0
      %v1154 = vpop.f32.mrb[0].mxu0
      %v1155 = vadd.f32 0.0, %v1154
      %v1156 = vpop.f32.mrb[0].mxu0
      %1157 = vmatprep.mubr.bf16.mxu0 %v903
      %1158 = vmatmul.mubr.bf16.gmra.mrb[0].mxu0 %v724
      %v1159 = vpop.f32.mrb[0].mxu0
      %v1160 = vadd.f32 0.0, %v1159
      %v1161 = vpop.f32.mrb[0].mxu0
      %v1162 = vpop.f32.mrb[0].mxu0
      %v1163 = vadd.f32 0.0, %v1162
      %v1164 = vpop.f32.mrb[0].mxu0
      %1165 = vmatprep.mubr.bf16.mxu0 %v906
      %1166 = vmatmul.mubr.bf16.gmra.mrb[0].mxu0 %v726
      %v1167 = vpop.f32.mrb[0].mxu0
      %v1168 = vadd.f32 0.0, %v1167
      %v1169 = vpop.f32.mrb[0].mxu0
      %v1170 = vpop.f32.mrb[0].mxu0
      %v1171 = vadd.f32 0.0, %v1170
      %v1172 = vpop.f32.mrb[0].mxu0
      %1173 = vmatprep.mubr.bf16.mxu0 %v909
      %1174 = vmatmul.mubr.bf16.gmra.mrb[0].mxu0 %v728
      %v1175 = vpop.f32.mrb[0].mxu0
      %v1176 = vadd.f32 0.0, %v1175
      %v1177 = vpop.f32.mrb[0].mxu0
      %v1178 = vpop.f32.mrb[0].mxu0
      %v1179 = vadd.f32 0.0, %v1178
      %v1180 = vpop.f32.mrb[0].mxu0
      %1181 = vmatprep.mubr.bf16.mxu0 %v912
      %1182 = vmatmul.mubr.bf16.gmra.mrb[0].mxu0 %v730
      %v1183 = vpop.f32.mrb[0].mxu0
      %v1184 = vadd.f32 0.0, %v1183
      %v1185 = vpop.f32.mrb[0].mxu0
      %v1186 = vpop.f32.mrb[0].mxu0
      %v1187 = vadd.f32 0.0, %v1186
      %v1188 = vpop.f32.mrb[0].mxu0
      %1189 = vmatprep.mubr.bf16.mxu0 %v915
      %1190 = vmatmul.mubr.bf16.gmra.mrb[0].mxu0 %v732
      %v1191 = vpop.f32.mrb[0].mxu0
      %v1192 = vadd.f32 0.0, %v1191
      %v1193 = vpop.f32.mrb[0].mxu0
      %v1194 = vpop.f32.mrb[0].mxu0
      %v1195 = vadd.f32 0.0, %v1194
      %v1196 = vpop.f32.mrb[0].mxu0
      %1197 = vmatprep.mubr.bf16.mxu0 %v918
      %1198 = vmatmul.mubr.bf16.gmra.mrb[0].mxu0 %v734
      %v1199 = vpop.f32.mrb[0].mxu0
      %v1200 = vadd.f32 0.0, %v1199
      %v1201 = vpop.f32.mrb[0].mxu0
      %v1202 = vpop.f32.mrb[0].mxu0
      %v1203 = vadd.f32 0.0, %v1202
      %v1204 = vpop.f32.mrb[0].mxu0
      %1205 = vmatprep.mubr.bf16.mxu0 %v921
      %1206 = vmatmul.mubr.bf16.gmra.mrb[0].mxu0 %v736
      %v1207 = vpop.f32.mrb[0].mxu0
      %v1208 = vadd.f32 0.0, %v1207
      %v1209 = vpop.f32.mrb[0].mxu0
      %v1210 = vpop.f32.mrb[0].mxu0
      %v1211 = vadd.f32 0.0, %v1210
      %v1212 = vpop.f32.mrb[0].mxu0
      %1213 = vmatprep.mubr.bf16.mxu0 %v924
      %1214 = vmatmul.mubr.bf16.gmra.mrb[0].mxu0 %v738
      %v1215 = vpop.f32.mrb[0].mxu0
      %v1216 = vadd.f32 0.0, %v1215
      %v1217 = vpop.f32.mrb[0].mxu0
      %v1218 = vpop.f32.mrb[0].mxu0
      %v1219 = vadd.f32 0.0, %v1218
      %v1220 = vpop.f32.mrb[0].mxu0
      %1221 = vdwg.mxu0
      %v1222 = vadd.f32 %v337, %v968
      %v1223 = vadd.f32 %v338, %v971
      %v1224 = vadd.f32 %v339, %v976
      %v1225 = vadd.f32 %v340, %v979
      %v1226 = vadd.f32 %v341, %v984
      %v1227 = vadd.f32 %v342, %v987
      %v1228 = vadd.f32 %v343, %v992
      %v1229 = vadd.f32 %v344, %v995
      %v1230 = vadd.f32 %v345, %v1000
      %v1231 = vadd.f32 %v346, %v1003
      %v1232 = vadd.f32 %v347, %v1008
      %v1233 = vadd.f32 %v348, %v1011
      %v1234 = vadd.f32 %v349, %v1016
      %v1235 = vadd.f32 %v350, %v1019
      %v1236 = vadd.f32 %v351, %v1024
      %v1237 = vadd.f32 %v352, %v1027
      %v1238 = vadd.f32 %v353, %v1032
      %v1239 = vadd.f32 %v354, %v1035
      %v1240 = vadd.f32 %v355, %v1040
      %v1241 = vadd.f32 %v356, %v1043
      %v1242 = vadd.f32 %v357, %v1048
      %v1243 = vadd.f32 %v358, %v1051
      %v1244 = vadd.f32 %v359, %v1056
      %v1245 = vadd.f32 %v360, %v1059
      %v1246 = vadd.f32 %v361, %v1064
      %v1247 = vadd.f32 %v362, %v1067
      %v1248 = vadd.f32 %v363, %v1072
      %v1249 = vadd.f32 %v364, %v1075
      %v1250 = vadd.f32 %v365, %v1080
      %v1251 = vadd.f32 %v366, %v1083
      %v1252 = vadd.f32 %v367, %v1088
      %v1253 = vadd.f32 %v368, %v1091
      %v1254 = vadd.f32 %v369, %v1096
      %v1255 = vadd.f32 %v370, %v1099
      %v1256 = vadd.f32 %v371, %v1104
      %v1257 = vadd.f32 %v372, %v1107
      %v1258 = vadd.f32 %v373, %v1112
      %v1259 = vadd.f32 %v374, %v1115
      %v1260 = vadd.f32 %v375, %v1120
      %v1261 = vadd.f32 %v376, %v1123
      %v1262 = vadd.f32 %v377, %v1128
      %v1263 = vadd.f32 %v378, %v1131
      %v1264 = vadd.f32 %v379, %v1136
      %v1265 = vadd.f32 %v380, %v1139
      %v1266 = vadd.f32 %v381, %v1144
      %v1267 = vadd.f32 %v382, %v1147
      %v1268 = vadd.f32 %v383, %v1152
      %v1269 = vadd.f32 %v384, %v1155
      %v1270 = vadd.f32 %v385, %v1160
      %v1271 = vadd.f32 %v386, %v1163
      %v1272 = vadd.f32 %v387, %v1168
      %v1273 = vadd.f32 %v388, %v1171
      %v1274 = vadd.f32 %v389, %v1176
      %v1275 = vadd.f32 %v390, %v1179
      %v1276 = vadd.f32 %v391, %v1184
      %v1277 = vadd.f32 %v392, %v1187
      %v1278 = vadd.f32 %v393, %v1192
      %v1279 = vadd.f32 %v394, %v1195
      %v1280 = vadd.f32 %v395, %v1200
      %v1281 = vadd.f32 %v396, %v1203
      %v1282 = vadd.f32 %v397, %v1208
      %v1283 = vadd.f32 %v398, %v1211
      %v1284 = vadd.f32 %v399, %v1216
      %v1285 = vadd.f32 %v400, %v1219
      %vm1286 = vcmask 523264
      %1287 = vst.msk [vmem:[#allocation2] sm:$0xff] %vm1286, %v1222
      %1288 = vst.msk [vmem:[#allocation2 + $0x8] sm:$0xff] %vm1286, %v1223
      %1289 = vst.msk [vmem:[#allocation2 + $0x10] sm:$0xff] %vm1286, %v1224
      %1290 = vst.msk [vmem:[#allocation2 + $0x18] sm:$0xff] %vm1286, %v1225
      %1291 = vst.msk [vmem:[#allocation2 + $0x20] sm:$0xff] %vm1286, %v1226
      %1292 = vst.msk [vmem:[#allocation2 + $0x28] sm:$0xff] %vm1286, %v1227
      %1293 = vst.msk [vmem:[#allocation2 + $0x30] sm:$0xff] %vm1286, %v1228
      %1294 = vst.msk [vmem:[#allocation2 + $0x38] sm:$0xff] %vm1286, %v1229
      %1295 = vst.msk [vmem:[#allocation2 + $0x40] sm:$0xff] %vm1286, %v1230
      %1296 = vst.msk [vmem:[#allocation2 + $0x48] sm:$0xff] %vm1286, %v1231
      %1297 = vst.msk [vmem:[#allocation2 + $0x50] sm:$0xff] %vm1286, %v1232
      %1298 = vst.msk [vmem:[#allocation2 + $0x58] sm:$0xff] %vm1286, %v1233
      %1299 = vst.msk [vmem:[#allocation2 + $0x60] sm:$0xff] %vm1286, %v1234
      %1300 = vst.msk [vmem:[#allocation2 + $0x68] sm:$0xff] %vm1286, %v1235
      %1301 = vst.msk [vmem:[#allocation2 + $0x70] sm:$0xff] %vm1286, %v1236
      %1302 = vst.msk [vmem:[#allocation2 + $0x78] sm:$0xff] %vm1286, %v1237
      %1303 = vst.msk [vmem:[#allocation2 + $0x80] sm:$0xff] %vm1286, %v1238
      %1304 = vst.msk [vmem:[#allocation2 + $0x88] sm:$0xff] %vm1286, %v1239
      %1305 = vst.msk [vmem:[#allocation2 + $0x90] sm:$0xff] %vm1286, %v1240
      %1306 = vst.msk [vmem:[#allocation2 + $0x98] sm:$0xff] %vm1286, %v1241
      %1307 = vst.msk [vmem:[#allocation2 + $0xa0] sm:$0xff] %vm1286, %v1242
      %1308 = vst.msk [vmem:[#allocation2 + $0xa8] sm:$0xff] %vm1286, %v1243
      %1309 = vst.msk [vmem:[#allocation2 + $0xb0] sm:$0xff] %vm1286, %v1244
      %1310 = vst.msk [vmem:[#allocation2 + $0xb8] sm:$0xff] %vm1286, %v1245
      %1311 = vst.msk [vmem:[#allocation2 + $0xc0] sm:$0xff] %vm1286, %v1246
      %1312 = vst.msk [vmem:[#allocation2 + $0xc8] sm:$0xff] %vm1286, %v1247
      %1313 = vst.msk [vmem:[#allocation2 + $0xd0] sm:$0xff] %vm1286, %v1248
      %1314 = vst.msk [vmem:[#allocation2 + $0xd8] sm:$0xff] %vm1286, %v1249
      %1315 = vst.msk [vmem:[#allocation2 + $0xe0] sm:$0xff] %vm1286, %v1250
      %1316 = vst.msk [vmem:[#allocation2 + $0xe8] sm:$0xff] %vm1286, %v1251
      %1317 = vst.msk [vmem:[#allocation2 + $0xf0] sm:$0xff] %vm1286, %v1252
      %1318 = vst.msk [vmem:[#allocation2 + $0xf8] sm:$0xff] %vm1286, %v1253
      %1319 = vst.msk [vmem:[#allocation2 + $0x100] sm:$0xff] %vm1286, %v1254
      %1320 = vst.msk [vmem:[#allocation2 + $0x108] sm:$0xff] %vm1286, %v1255
      %1321 = vst.msk [vmem:[#allocation2 + $0x110] sm:$0xff] %vm1286, %v1256
      %1322 = vst.msk [vmem:[#allocation2 + $0x118] sm:$0xff] %vm1286, %v1257
      %1323 = vst.msk [vmem:[#allocation2 + $0x120] sm:$0xff] %vm1286, %v1258
      %1324 = vst.msk [vmem:[#allocation2 + $0x128] sm:$0xff] %vm1286, %v1259
      %1325 = vst.msk [vmem:[#allocation2 + $0x130] sm:$0xff] %vm1286, %v1260
      %1326 = vst.msk [vmem:[#allocation2 + $0x138] sm:$0xff] %vm1286, %v1261
      %1327 = vst.msk [vmem:[#allocation2 + $0x140] sm:$0xff] %vm1286, %v1262
      %1328 = vst.msk [vmem:[#allocation2 + $0x148] sm:$0xff] %vm1286, %v1263
      %1329 = vst.msk [vmem:[#allocation2 + $0x150] sm:$0xff] %vm1286, %v1264
      %1330 = vst.msk [vmem:[#allocation2 + $0x158] sm:$0xff] %vm1286, %v1265
      %1331 = vst.msk [vmem:[#allocation2 + $0x160] sm:$0xff] %vm1286, %v1266
      %1332 = vst.msk [vmem:[#allocation2 + $0x168] sm:$0xff] %vm1286, %v1267
      %1333 = vst.msk [vmem:[#allocation2 + $0x170] sm:$0xff] %vm1286, %v1268
      %1334 = vst.msk [vmem:[#allocation2 + $0x178] sm:$0xff] %vm1286, %v1269
      %1335 = vst.msk [vmem:[#allocation2 + $0x180] sm:$0xff] %vm1286, %v1270
      %1336 = vst.msk [vmem:[#allocation2 + $0x188] sm:$0xff] %vm1286, %v1271
      %1337 = vst.msk [vmem:[#allocation2 + $0x190] sm:$0xff] %vm1286, %v1272
      %1338 = vst.msk [vmem:[#allocation2 + $0x198] sm:$0xff] %vm1286, %v1273
      %1339 = vst.msk [vmem:[#allocation2 + $0x1a0] sm:$0xff] %vm1286, %v1274
      %1340 = vst.msk [vmem:[#allocation2 + $0x1a8] sm:$0xff] %vm1286, %v1275
      %1341 = vst.msk [vmem:[#allocation2 + $0x1b0] sm:$0xff] %vm1286, %v1276
      %1342 = vst.msk [vmem:[#allocation2 + $0x1b8] sm:$0xff] %vm1286, %v1277
      %1343 = vst.msk [vmem:[#allocation2 + $0x1c0] sm:$0xff] %vm1286, %v1278
      %1344 = vst.msk [vmem:[#allocation2 + $0x1c8] sm:$0xff] %vm1286, %v1279
      %1345 = vst.msk [vmem:[#allocation2 + $0x1d0] sm:$0xff] %vm1286, %v1280
      %1346 = vst.msk [vmem:[#allocation2 + $0x1d8] sm:$0xff] %vm1286, %v1281
      %1347 = vst.msk [vmem:[#allocation2 + $0x1e0] sm:$0xff] %vm1286, %v1282
      %1348 = vst.msk [vmem:[#allocation2 + $0x1e8] sm:$0xff] %vm1286, %v1283
      %1349 = vst.msk [vmem:[#allocation2 + $0x1f0] sm:$0xff] %vm1286, %v1284
      %1350 = vst.msk [vmem:[#allocation2 + $0x1f8] sm:$0xff] %vm1286, %v1285
      // Predicated region
      $region37: #{tpu_custom_call.1} parent=31 // pred_check
        %p1351 = pneg %p268
      $region38: #{tpu_custom_call.1} parent=31 // pred_check_branch
        %1353 = sbr.rel (%p1351) target = $region40
      $region39: #{tpu_custom_call.1} parent=31 // pred_region
        %v1354 = vld [vmem:[#allocation2] sm:$0xff]
        %v1355 = vld [vmem:[#allocation2 + $0x8] sm:$0xff]
        %v1356 = vld [vmem:[#allocation2 + $0x10] sm:$0xff]
        %v1357 = vld [vmem:[#allocation2 + $0x18] sm:$0xff]
        %v1358 = vld [vmem:[#allocation2 + $0x20] sm:$0xff]
        %v1359 = vld [vmem:[#allocation2 + $0x28] sm:$0xff]
        %v1360 = vld [vmem:[#allocation2 + $0x30] sm:$0xff]
        %v1361 = vld [vmem:[#allocation2 + $0x38] sm:$0xff]
        %v1362 = vld [vmem:[#allocation2 + $0x40] sm:$0xff]
        %v1363 = vld [vmem:[#allocation2 + $0x48] sm:$0xff]
        %v1364 = vld [vmem:[#allocation2 + $0x50] sm:$0xff]
        %v1365 = vld [vmem:[#allocation2 + $0x58] sm:$0xff]
        %v1366 = vld [vmem:[#allocation2 + $0x60] sm:$0xff]
        %v1367 = vld [vmem:[#allocation2 + $0x68] sm:$0xff]
        %v1368 = vld [vmem:[#allocation2 + $0x70] sm:$0xff]
        %v1369 = vld [vmem:[#allocation2 + $0x78] sm:$0xff]
        %v1370 = vld [vmem:[#allocation2 + $0x80] sm:$0xff]
        %v1371 = vld [vmem:[#allocation2 + $0x88] sm:$0xff]
        %v1372 = vld [vmem:[#allocation2 + $0x90] sm:$0xff]
        %v1373 = vld [vmem:[#allocation2 + $0x98] sm:$0xff]
        %v1374 = vld [vmem:[#allocation2 + $0xa0] sm:$0xff]
        %v1375 = vld [vmem:[#allocation2 + $0xa8] sm:$0xff]
        %v1376 = vld [vmem:[#allocation2 + $0xb0] sm:$0xff]
        %v1377 = vld [vmem:[#allocation2 + $0xb8] sm:$0xff]
        %v1378 = vld [vmem:[#allocation2 + $0xc0] sm:$0xff]
        %v1379 = vld [vmem:[#allocation2 + $0xc8] sm:$0xff]
        %v1380 = vld [vmem:[#allocation2 + $0xd0] sm:$0xff]
        %v1381 = vld [vmem:[#allocation2 + $0xd8] sm:$0xff]
        %v1382 = vld [vmem:[#allocation2 + $0xe0] sm:$0xff]
        %v1383 = vld [vmem:[#allocation2 + $0xe8] sm:$0xff]
        %v1384 = vld [vmem:[#allocation2 + $0xf0] sm:$0xff]
        %v1385 = vld [vmem:[#allocation2 + $0xf8] sm:$0xff]
        %v1386 = vld [vmem:[#allocation2 + $0x100] sm:$0xff]
        %v1387 = vld [vmem:[#allocation2 + $0x108] sm:$0xff]
        %v1388 = vld [vmem:[#allocation2 + $0x110] sm:$0xff]
        %v1389 = vld [vmem:[#allocation2 + $0x118] sm:$0xff]
        %v1390 = vld [vmem:[#allocation2 + $0x120] sm:$0xff]
        %v1391 = vld [vmem:[#allocation2 + $0x128] sm:$0xff]
        %v1392 = vld [vmem:[#allocation2 + $0x130] sm:$0xff]
        %v1393 = vld [vmem:[#allocation2 + $0x138] sm:$0xff]
        %v1394 = vld [vmem:[#allocation2 + $0x140] sm:$0xff]
        %v1395 = vld [vmem:[#allocation2 + $0x148] sm:$0xff]
        %v1396 = vld [vmem:[#allocation2 + $0x150] sm:$0xff]
        %v1397 = vld [vmem:[#allocation2 + $0x158] sm:$0xff]
        %v1398 = vld [vmem:[#allocation2 + $0x160] sm:$0xff]
        %v1399 = vld [vmem:[#allocation2 + $0x168] sm:$0xff]
        %v1400 = vld [vmem:[#allocation2 + $0x170] sm:$0xff]
        %v1401 = vld [vmem:[#allocation2 + $0x178] sm:$0xff]
        %v1402 = vld [vmem:[#allocation2 + $0x180] sm:$0xff]
        %v1403 = vld [vmem:[#allocation2 + $0x188] sm:$0xff]
        %v1404 = vld [vmem:[#allocation2 + $0x190] sm:$0xff]
        %v1405 = vld [vmem:[#allocation2 + $0x198] sm:$0xff]
        %v1406 = vld [vmem:[#allocation2 + $0x1a0] sm:$0xff]
        %v1407 = vld [vmem:[#allocation2 + $0x1a8] sm:$0xff]
        %v1408 = vld [vmem:[#allocation2 + $0x1b0] sm:$0xff]
        %v1409 = vld [vmem:[#allocation2 + $0x1b8] sm:$0xff]
        %v1410 = vld [vmem:[#allocation2 + $0x1c0] sm:$0xff]
        %v1411 = vld [vmem:[#allocation2 + $0x1c8] sm:$0xff]
        %v1412 = vld [vmem:[#allocation2 + $0x1d0] sm:$0xff]
        %v1413 = vld [vmem:[#allocation2 + $0x1d8] sm:$0xff]
        %v1414 = vld [vmem:[#allocation2 + $0x1e0] sm:$0xff]
        %v1415 = vld [vmem:[#allocation2 + $0x1e8] sm:$0xff]
        %v1416 = vld [vmem:[#allocation2 + $0x1f0] sm:$0xff]
        %v1417 = vld [vmem:[#allocation2 + $0x1f8] sm:$0xff]
        %v1418 = vld [vmem:[%s257] sm:$0x1]
        %v1420 = vlaneseq
        %v1421 = vshrl.u32 %v1420, 7
        %v1422 = vsub.s32 0, %v1421
        %v1423 = vrot.slane %v1418, %v1422
        %v1425 = vadd.f32 %v1354, %v1423
        %v1426 = vadd.f32 %v1355, %v1423
        %v1427 = vadd.f32 %v1356, %v1423
        %v1428 = vadd.f32 %v1357, %v1423
        %v1429 = vadd.f32 %v1358, %v1423
        %v1430 = vadd.f32 %v1359, %v1423
        %v1431 = vadd.f32 %v1360, %v1423
        %v1432 = vadd.f32 %v1361, %v1423
        %v1433 = vadd.f32 %v1362, %v1423
        %v1434 = vadd.f32 %v1363, %v1423
        %v1435 = vadd.f32 %v1364, %v1423
        %v1436 = vadd.f32 %v1365, %v1423
        %v1437 = vadd.f32 %v1366, %v1423
        %v1438 = vadd.f32 %v1367, %v1423
        %v1439 = vadd.f32 %v1368, %v1423
        %v1440 = vadd.f32 %v1369, %v1423
        %v1441 = vadd.f32 %v1370, %v1423
        %v1442 = vadd.f32 %v1371, %v1423
        %v1443 = vadd.f32 %v1372, %v1423
        %v1444 = vadd.f32 %v1373, %v1423
        %v1445 = vadd.f32 %v1374, %v1423
        %v1446 = vadd.f32 %v1375, %v1423
        %v1447 = vadd.f32 %v1376, %v1423
        %v1448 = vadd.f32 %v1377, %v1423
        %v1449 = vadd.f32 %v1378, %v1423
        %v1450 = vadd.f32 %v1379, %v1423
        %v1451 = vadd.f32 %v1380, %v1423
        %v1452 = vadd.f32 %v1381, %v1423
        %v1453 = vadd.f32 %v1382, %v1423
        %v1454 = vadd.f32 %v1383, %v1423
        %v1455 = vadd.f32 %v1384, %v1423
        %v1456 = vadd.f32 %v1385, %v1423
        %v1457 = vadd.f32 %v1386, %v1423
        %v1458 = vadd.f32 %v1387, %v1423
        %v1459 = vadd.f32 %v1388, %v1423
        %v1460 = vadd.f32 %v1389, %v1423
        %v1461 = vadd.f32 %v1390, %v1423
        %v1462 = vadd.f32 %v1391, %v1423
        %v1463 = vadd.f32 %v1392, %v1423
        %v1464 = vadd.f32 %v1393, %v1423
        %v1465 = vadd.f32 %v1394, %v1423
        %v1466 = vadd.f32 %v1395, %v1423
        %v1467 = vadd.f32 %v1396, %v1423
        %v1468 = vadd.f32 %v1397, %v1423
        %v1469 = vadd.f32 %v1398, %v1423
        %v1470 = vadd.f32 %v1399, %v1423
        %v1471 = vadd.f32 %v1400, %v1423
        %v1472 = vadd.f32 %v1401, %v1423
        %v1473 = vadd.f32 %v1402, %v1423
        %v1474 = vadd.f32 %v1403, %v1423
        %v1475 = vadd.f32 %v1404, %v1423
        %v1476 = vadd.f32 %v1405, %v1423
        %v1477 = vadd.f32 %v1406, %v1423
        %v1478 = vadd.f32 %v1407, %v1423
        %v1479 = vadd.f32 %v1408, %v1423
        %v1480 = vadd.f32 %v1409, %v1423
        %v1481 = vadd.f32 %v1410, %v1423
        %v1482 = vadd.f32 %v1411, %v1423
        %v1483 = vadd.f32 %v1412, %v1423
        %v1484 = vadd.f32 %v1413, %v1423
        %v1485 = vadd.f32 %v1414, %v1423
        %v1486 = vadd.f32 %v1415, %v1423
        %v1487 = vadd.f32 %v1416, %v1423
        %v1488 = vadd.f32 %v1417, %v1423
        %v1489 = vmax.f32 %v1425, 0.0
        %v1490 = vmax.f32 %v1426, 0.0
        %v1491 = vmax.f32 %v1427, 0.0
        %v1492 = vmax.f32 %v1428, 0.0
        %v1493 = vmax.f32 %v1429, 0.0
        %v1494 = vmax.f32 %v1430, 0.0
        %v1495 = vmax.f32 %v1431, 0.0
        %v1496 = vmax.f32 %v1432, 0.0
        %v1497 = vmax.f32 %v1433, 0.0
        %v1498 = vmax.f32 %v1434, 0.0
        %v1499 = vmax.f32 %v1435, 0.0
        %v1500 = vmax.f32 %v1436, 0.0
        %v1501 = vmax.f32 %v1437, 0.0
        %v1502 = vmax.f32 %v1438, 0.0
        %v1503 = vmax.f32 %v1439, 0.0
        %v1504 = vmax.f32 %v1440, 0.0
        %v1505 = vmax.f32 %v1441, 0.0
        %v1506 = vmax.f32 %v1442, 0.0
        %v1507 = vmax.f32 %v1443, 0.0
        %v1508 = vmax.f32 %v1444, 0.0
        %v1509 = vmax.f32 %v1445, 0.0
        %v1510 = vmax.f32 %v1446, 0.0
        %v1511 = vmax.f32 %v1447, 0.0
        %v1512 = vmax.f32 %v1448, 0.0
        %v1513 = vmax.f32 %v1449, 0.0
        %v1514 = vmax.f32 %v1450, 0.0
        %v1515 = vmax.f32 %v1451, 0.0
        %v1516 = vmax.f32 %v1452, 0.0
        %v1517 = vmax.f32 %v1453, 0.0
        %v1518 = vmax.f32 %v1454, 0.0
        %v1519 = vmax.f32 %v1455, 0.0
        %v1520 = vmax.f32 %v1456, 0.0
        %v1521 = vmax.f32 %v1457, 0.0
        %v1522 = vmax.f32 %v1458, 0.0
        %v1523 = vmax.f32 %v1459, 0.0
        %v1524 = vmax.f32 %v1460, 0.0
        %v1525 = vmax.f32 %v1461, 0.0
        %v1526 = vmax.f32 %v1462, 0.0
        %v1527 = vmax.f32 %v1463, 0.0
        %v1528 = vmax.f32 %v1464, 0.0
        %v1529 = vmax.f32 %v1465, 0.0
        %v1530 = vmax.f32 %v1466, 0.0
        %v1531 = vmax.f32 %v1467, 0.0
        %v1532 = vmax.f32 %v1468, 0.0
        %v1533 = vmax.f32 %v1469, 0.0
        %v1534 = vmax.f32 %v1470, 0.0
        %v1535 = vmax.f32 %v1471, 0.0
        %v1536 = vmax.f32 %v1472, 0.0
        %v1537 = vmax.f32 %v1473, 0.0
        %v1538 = vmax.f32 %v1474, 0.0
        %v1539 = vmax.f32 %v1475, 0.0
        %v1540 = vmax.f32 %v1476, 0.0
        %v1541 = vmax.f32 %v1477, 0.0
        %v1542 = vmax.f32 %v1478, 0.0
        %v1543 = vmax.f32 %v1479, 0.0
        %v1544 = vmax.f32 %v1480, 0.0
        %v1545 = vmax.f32 %v1481, 0.0
        %v1546 = vmax.f32 %v1482, 0.0
        %v1547 = vmax.f32 %v1483, 0.0
        %v1548 = vmax.f32 %v1484, 0.0
        %v1549 = vmax.f32 %v1485, 0.0
        %v1550 = vmax.f32 %v1486, 0.0
        %v1551 = vmax.f32 %v1487, 0.0
        %v1552 = vmax.f32 %v1488, 0.0
        %v1553 = vpack.c.bf16 %v1490, %v1489
        %v1554 = vpack.c.bf16 %v1492, %v1491
        %v1555 = vpack.c.bf16 %v1494, %v1493
        %v1556 = vpack.c.bf16 %v1496, %v1495
        %v1557 = vpack.c.bf16 %v1498, %v1497
        %v1558 = vpack.c.bf16 %v1500, %v1499
        %v1559 = vpack.c.bf16 %v1502, %v1501
        %v1560 = vpack.c.bf16 %v1504, %v1503
        %v1561 = vpack.c.bf16 %v1506, %v1505
        %v1562 = vpack.c.bf16 %v1508, %v1507
        %v1563 = vpack.c.bf16 %v1510, %v1509
        %v1564 = vpack.c.bf16 %v1512, %v1511
        %v1565 = vpack.c.bf16 %v1514, %v1513
        %v1566 = vpack.c.bf16 %v1516, %v1515
        %v1567 = vpack.c.bf16 %v1518, %v1517
        %v1568 = vpack.c.bf16 %v1520, %v1519
        %v1569 = vpack.c.bf16 %v1522, %v1521
        %v1570 = vpack.c.bf16 %v1524, %v1523
        %v1571 = vpack.c.bf16 %v1526, %v1525
        %v1572 = vpack.c.bf16 %v1528, %v1527
        %v1573 = vpack.c.bf16 %v1530, %v1529
        %v1574 = vpack.c.bf16 %v1532, %v1531
        %v1575 = vpack.c.bf16 %v1534, %v1533
        %v1576 = vpack.c.bf16 %v1536, %v1535
        %v1577 = vpack.c.bf16 %v1538, %v1537
        %v1578 = vpack.c.bf16 %v1540, %v1539
        %v1579 = vpack.c.bf16 %v1542, %v1541
        %v1580 = vpack.c.bf16 %v1544, %v1543
        %v1581 = vpack.c.bf16 %v1546, %v1545
        %v1582 = vpack.c.bf16 %v1548, %v1547
        %v1583 = vpack.c.bf16 %v1550, %v1549
        %v1584 = vpack.c.bf16 %v1552, %v1551
        %v1617 = vunpack.c.l.b16 %v1553
        %v1618 = vunpack.c.h.b16 %v1553
        %v1619 = vunpack.c.l.b16 %v1554
        %v1620 = vunpack.c.h.b16 %v1554
        %v1621 = vunpack.c.l.b16 %v1555
        %v1622 = vunpack.c.h.b16 %v1555
        %v1623 = vunpack.c.l.b16 %v1556
        %v1624 = vunpack.c.h.b16 %v1556
        %v1625 = vunpack.c.l.b16 %v1557
        %v1626 = vunpack.c.h.b16 %v1557
        %v1627 = vunpack.c.l.b16 %v1558
        %v1628 = vunpack.c.h.b16 %v1558
        %v1629 = vunpack.c.l.b16 %v1559
        %v1630 = vunpack.c.h.b16 %v1559
        %v1631 = vunpack.c.l.b16 %v1560
        %v1632 = vunpack.c.h.b16 %v1560
        %v1633 = vunpack.c.l.b16 %v1561
        %v1634 = vunpack.c.h.b16 %v1561
        %v1635 = vunpack.c.l.b16 %v1562
        %v1636 = vunpack.c.h.b16 %v1562
        %v1637 = vunpack.c.l.b16 %v1563
        %v1638 = vunpack.c.h.b16 %v1563
        %v1639 = vunpack.c.l.b16 %v1564
        %v1640 = vunpack.c.h.b16 %v1564
        %v1641 = vunpack.c.l.b16 %v1565
        %v1642 = vunpack.c.h.b16 %v1565
        %v1643 = vunpack.c.l.b16 %v1566
        %v1644 = vunpack.c.h.b16 %v1566
        %v1645 = vunpack.c.l.b16 %v1567
        %v1646 = vunpack.c.h.b16 %v1567
        %v1647 = vunpack.c.l.b16 %v1568
        %v1648 = vunpack.c.h.b16 %v1568
        %v1649 = vunpack.c.l.b16 %v1569
        %v1650 = vunpack.c.h.b16 %v1569
        %v1651 = vunpack.c.l.b16 %v1570
        %v1652 = vunpack.c.h.b16 %v1570
        %v1653 = vunpack.c.l.b16 %v1571
        %v1654 = vunpack.c.h.b16 %v1571
        %v1655 = vunpack.c.l.b16 %v1572
        %v1656 = vunpack.c.h.b16 %v1572
        %v1657 = vunpack.c.l.b16 %v1573
        %v1658 = vunpack.c.h.b16 %v1573
        %v1659 = vunpack.c.l.b16 %v1574
        %v1660 = vunpack.c.h.b16 %v1574
        %v1661 = vunpack.c.l.b16 %v1575
        %v1662 = vunpack.c.h.b16 %v1575
        %v1663 = vunpack.c.l.b16 %v1576
        %v1664 = vunpack.c.h.b16 %v1576
        %v1665 = vunpack.c.l.b16 %v1577
        %v1666 = vunpack.c.h.b16 %v1577
        %v1667 = vunpack.c.l.b16 %v1578
        %v1668 = vunpack.c.h.b16 %v1578
        %v1669 = vunpack.c.l.b16 %v1579
        %v1670 = vunpack.c.h.b16 %v1579
        %v1671 = vunpack.c.l.b16 %v1580
        %v1672 = vunpack.c.h.b16 %v1580
        %v1673 = vunpack.c.l.b16 %v1581
        %v1674 = vunpack.c.h.b16 %v1581
        %v1675 = vunpack.c.l.b16 %v1582
        %v1676 = vunpack.c.h.b16 %v1582
        %v1677 = vunpack.c.l.b16 %v1583
        %v1678 = vunpack.c.h.b16 %v1583
        %v1679 = vunpack.c.l.b16 %v1584
        %v1680 = vunpack.c.h.b16 %v1584
        %v1681 = vpack.c.b16 %v1617, %v1617
        %v1682 = vpack.c.b16 %v1618, %v1618
        %v1683 = vpack.c.b16 %v1619, %v1619
        %v1684 = vpack.c.b16 %v1620, %v1620
        %v1685 = vpack.c.b16 %v1621, %v1621
        %v1686 = vpack.c.b16 %v1622, %v1622
        %v1687 = vpack.c.b16 %v1623, %v1623
        %v1688 = vpack.c.b16 %v1624, %v1624
        %v1689 = vpack.c.b16 %v1625, %v1625
        %v1690 = vpack.c.b16 %v1626, %v1626
        %v1691 = vpack.c.b16 %v1627, %v1627
        %v1692 = vpack.c.b16 %v1628, %v1628
        %v1693 = vpack.c.b16 %v1629, %v1629
        %v1694 = vpack.c.b16 %v1630, %v1630
        %v1695 = vpack.c.b16 %v1631, %v1631
        %v1696 = vpack.c.b16 %v1632, %v1632
        %v1697 = vpack.c.b16 %v1633, %v1633
        %v1698 = vpack.c.b16 %v1634, %v1634
        %v1699 = vpack.c.b16 %v1635, %v1635
        %v1700 = vpack.c.b16 %v1636, %v1636
        %v1701 = vpack.c.b16 %v1637, %v1637
        %v1702 = vpack.c.b16 %v1638, %v1638
        %v1703 = vpack.c.b16 %v1639, %v1639
        %v1704 = vpack.c.b16 %v1640, %v1640
        %v1705 = vpack.c.b16 %v1641, %v1641
        %v1706 = vpack.c.b16 %v1642, %v1642
        %v1707 = vpack.c.b16 %v1643, %v1643
        %v1708 = vpack.c.b16 %v1644, %v1644
        %v1709 = vpack.c.b16 %v1645, %v1645
        %v1710 = vpack.c.b16 %v1646, %v1646
        %v1711 = vpack.c.b16 %v1647, %v1647
        %v1712 = vpack.c.b16 %v1648, %v1648
        %v1713 = vpack.c.b16 %v1649, %v1649
        %v1714 = vpack.c.b16 %v1650, %v1650
        %v1715 = vpack.c.b16 %v1651, %v1651
        %v1716 = vpack.c.b16 %v1652, %v1652
        %v1717 = vpack.c.b16 %v1653, %v1653
        %v1718 = vpack.c.b16 %v1654, %v1654
        %v1719 = vpack.c.b16 %v1655, %v1655
        %v1720 = vpack.c.b16 %v1656, %v1656
        %v1721 = vpack.c.b16 %v1657, %v1657
        %v1722 = vpack.c.b16 %v1658, %v1658
        %v1723 = vpack.c.b16 %v1659, %v1659
        %v1724 = vpack.c.b16 %v1660, %v1660
        %v1725 = vpack.c.b16 %v1661, %v1661
        %v1726 = vpack.c.b16 %v1662, %v1662
        %v1727 = vpack.c.b16 %v1663, %v1663
        %v1728 = vpack.c.b16 %v1664, %v1664
        %v1729 = vpack.c.b16 %v1665, %v1665
        %v1730 = vpack.c.b16 %v1666, %v1666
        %v1731 = vpack.c.b16 %v1667, %v1667
        %v1732 = vpack.c.b16 %v1668, %v1668
        %v1733 = vpack.c.b16 %v1669, %v1669
        %v1734 = vpack.c.b16 %v1670, %v1670
        %v1735 = vpack.c.b16 %v1671, %v1671
        %v1736 = vpack.c.b16 %v1672, %v1672
        %v1737 = vpack.c.b16 %v1673, %v1673
        %v1738 = vpack.c.b16 %v1674, %v1674
        %v1739 = vpack.c.b16 %v1675, %v1675
        %v1740 = vpack.c.b16 %v1676, %v1676
        %v1741 = vpack.c.b16 %v1677, %v1677
        %v1742 = vpack.c.b16 %v1678, %v1678
        %v1743 = vpack.c.b16 %v1679, %v1679
        %v1744 = vpack.c.b16 %v1680, %v1680
        %vm1809 = vcmask 519168
        %1810 = vst.msk [vmem:[%s265] sm:$0xf] %vm1809, %v1681
        %1811 = vst.msk [vmem:[%s265 + $0x4] sm:$0xf] %vm1809, %v1682
        %1812 = vst.msk [vmem:[%s265 + $0x8] sm:$0xf] %vm1809, %v1683
        %1813 = vst.msk [vmem:[%s265 + $0xc] sm:$0xf] %vm1809, %v1684
        %1814 = vst.msk [vmem:[%s265 + $0x10] sm:$0xf] %vm1809, %v1685
        %1815 = vst.msk [vmem:[%s265 + $0x14] sm:$0xf] %vm1809, %v1686
        %1816 = vst.msk [vmem:[%s265 + $0x18] sm:$0xf] %vm1809, %v1687
        %1817 = vst.msk [vmem:[%s265 + $0x1c] sm:$0xf] %vm1809, %v1688
        %1818 = vst.msk [vmem:[%s265 + $0x20] sm:$0xf] %vm1809, %v1689
        %1819 = vst.msk [vmem:[%s265 + $0x24] sm:$0xf] %vm1809, %v1690
        %1820 = vst.msk [vmem:[%s265 + $0x28] sm:$0xf] %vm1809, %v1691
        %1821 = vst.msk [vmem:[%s265 + $0x2c] sm:$0xf] %vm1809, %v1692
        %1822 = vst.msk [vmem:[%s265 + $0x30] sm:$0xf] %vm1809, %v1693
        %1823 = vst.msk [vmem:[%s265 + $0x34] sm:$0xf] %vm1809, %v1694
        %1824 = vst.msk [vmem:[%s265 + $0x38] sm:$0xf] %vm1809, %v1695
        %1825 = vst.msk [vmem:[%s265 + $0x3c] sm:$0xf] %vm1809, %v1696
        %1826 = vst.msk [vmem:[%s265 + $0x40] sm:$0xf] %vm1809, %v1697
        %1827 = vst.msk [vmem:[%s265 + $0x44] sm:$0xf] %vm1809, %v1698
        %1828 = vst.msk [vmem:[%s265 + $0x48] sm:$0xf] %vm1809, %v1699
        %1829 = vst.msk [vmem:[%s265 + $0x4c] sm:$0xf] %vm1809, %v1700
        %1830 = vst.msk [vmem:[%s265 + $0x50] sm:$0xf] %vm1809, %v1701
        %1831 = vst.msk [vmem:[%s265 + $0x54] sm:$0xf] %vm1809, %v1702
        %1832 = vst.msk [vmem:[%s265 + $0x58] sm:$0xf] %vm1809, %v1703
        %1833 = vst.msk [vmem:[%s265 + $0x5c] sm:$0xf] %vm1809, %v1704
        %1834 = vst.msk [vmem:[%s265 + $0x60] sm:$0xf] %vm1809, %v1705
        %1835 = vst.msk [vmem:[%s265 + $0x64] sm:$0xf] %vm1809, %v1706
        %1836 = vst.msk [vmem:[%s265 + $0x68] sm:$0xf] %vm1809, %v1707
        %1837 = vst.msk [vmem:[%s265 + $0x6c] sm:$0xf] %vm1809, %v1708
        %1838 = vst.msk [vmem:[%s265 + $0x70] sm:$0xf] %vm1809, %v1709
        %1839 = vst.msk [vmem:[%s265 + $0x74] sm:$0xf] %vm1809, %v1710
        %1840 = vst.msk [vmem:[%s265 + $0x78] sm:$0xf] %vm1809, %v1711
        %1841 = vst.msk [vmem:[%s265 + $0x7c] sm:$0xf] %vm1809, %v1712
        %1842 = vst.msk [vmem:[%s265 + $0x80] sm:$0xf] %vm1809, %v1713
        %1843 = vst.msk [vmem:[%s265 + $0x84] sm:$0xf] %vm1809, %v1714
        %1844 = vst.msk [vmem:[%s265 + $0x88] sm:$0xf] %vm1809, %v1715
        %1845 = vst.msk [vmem:[%s265 + $0x8c] sm:$0xf] %vm1809, %v1716
        %1846 = vst.msk [vmem:[%s265 + $0x90] sm:$0xf] %vm1809, %v1717
        %1847 = vst.msk [vmem:[%s265 + $0x94] sm:$0xf] %vm1809, %v1718
        %1848 = vst.msk [vmem:[%s265 + $0x98] sm:$0xf] %vm1809, %v1719
        %1849 = vst.msk [vmem:[%s265 + $0x9c] sm:$0xf] %vm1809, %v1720
        %1850 = vst.msk [vmem:[%s265 + $0xa0] sm:$0xf] %vm1809, %v1721
        %1851 = vst.msk [vmem:[%s265 + $0xa4] sm:$0xf] %vm1809, %v1722
        %1852 = vst.msk [vmem:[%s265 + $0xa8] sm:$0xf] %vm1809, %v1723
        %1853 = vst.msk [vmem:[%s265 + $0xac] sm:$0xf] %vm1809, %v1724
        %1854 = vst.msk [vmem:[%s265 + $0xb0] sm:$0xf] %vm1809, %v1725
        %1855 = vst.msk [vmem:[%s265 + $0xb4] sm:$0xf] %vm1809, %v1726
        %1856 = vst.msk [vmem:[%s265 + $0xb8] sm:$0xf] %vm1809, %v1727
        %1857 = vst.msk [vmem:[%s265 + $0xbc] sm:$0xf] %vm1809, %v1728
        %1858 = vst.msk [vmem:[%s265 + $0xc0] sm:$0xf] %vm1809, %v1729
        %1859 = vst.msk [vmem:[%s265 + $0xc4] sm:$0xf] %vm1809, %v1730
        %1860 = vst.msk [vmem:[%s265 + $0xc8] sm:$0xf] %vm1809, %v1731
        %1861 = vst.msk [vmem:[%s265 + $0xcc] sm:$0xf] %vm1809, %v1732
        %1862 = vst.msk [vmem:[%s265 + $0xd0] sm:$0xf] %vm1809, %v1733
        %1863 = vst.msk [vmem:[%s265 + $0xd4] sm:$0xf] %vm1809, %v1734
        %1864 = vst.msk [vmem:[%s265 + $0xd8] sm:$0xf] %vm1809, %v1735
        %1865 = vst.msk [vmem:[%s265 + $0xdc] sm:$0xf] %vm1809, %v1736
        %1866 = vst.msk [vmem:[%s265 + $0xe0] sm:$0xf] %vm1809, %v1737
        %1867 = vst.msk [vmem:[%s265 + $0xe4] sm:$0xf] %vm1809, %v1738
        %1868 = vst.msk [vmem:[%s265 + $0xe8] sm:$0xf] %vm1809, %v1739
        %1869 = vst.msk [vmem:[%s265 + $0xec] sm:$0xf] %vm1809, %v1740
        %1870 = vst.msk [vmem:[%s265 + $0xf0] sm:$0xf] %vm1809, %v1741
        %1871 = vst.msk [vmem:[%s265 + $0xf4] sm:$0xf] %vm1809, %v1742
        %1872 = vst.msk [vmem:[%s265 + $0xf8] sm:$0xf] %vm1809, %v1743
        %1873 = vst.msk [vmem:[%s265 + $0xfc] sm:$0xf] %vm1809, %v1744
      $region40: #{tpu_custom_call.1} parent=31 // pred_fallthru
        _
      %s1874 = smul.u32 64, %s19
      %p1875 = scmp.lt.s32.totalorder %s1874, 255
      %s1876 = scalar_select %p1875, %s1874, 255
      %p1877 = scmp.lt.s32.totalorder %s20, 0
      %s1878 = scalar_select %p1877, %s20, 0
      %s1879 = sadd.s32 %s1878, %s1876
      %s1880 = smul.addr %s1879, 4
      %s1881 = scalar_lea.vmem %s3, %s1880
      // Predicated region
      $region41: #{tpu_custom_call.1} parent=31 // pred_check
        %p1882 = pneg %p135
      $region42: #{tpu_custom_call.1} parent=31 // pred_check_branch
        %1884 = sbr.rel (%p1882) target = $region44
      $region43: #{tpu_custom_call.1} parent=31 // pred_region
        %s1885 = smul.u32 64, %s19
      $region44: #{tpu_custom_call.1} parent=31 // pred_fallthru
        _
    $region32: #{tpu_custom_call.1} parent=5 // pred_fallthru
      _
    %p1886 = scmp.le.s32.totalorder 2, %s9
    // Predicated region
    $region45: #{tpu_custom_call.1} parent=5 // pred_check
      %p1887 = pneg %p1886
    $region46: #{tpu_custom_call.1} parent=5 // pred_check_branch
      %1889 = sbr.rel (%p1887) target = $region48
    $region47: #{tpu_custom_call.1} parent=5 // pred_region
      %s1890 = ssub.s32 %s9, 2
      // Predicated region
      $region49: #{tpu_custom_call.1} parent=47 // pred_check
        %p1891 = pneg %p141
      $region50: #{tpu_custom_call.1} parent=47 // pred_check_branch
        %1893 = sbr.rel (%p1891) target = $region52
      $region51: #{tpu_custom_call.1} parent=47 // pred_region
        %s1894 = smul.u32 64, %s22
        %p1895 = scmp.lt.s32.totalorder %s1894, 255
        %s1896 = scalar_select %p1895, %s1894, 255
        %p1897 = scmp.lt.s32.totalorder %s23, 0
        %s1898 = scalar_select %p1897, %s23, 0
        %s1899 = sadd.s32 %s1898, %s1896
        %s1900 = smul.addr %s1899, 4
        %s1901 = scalar_lea.vmem %s3, %s1900
      $region52: #{tpu_custom_call.1} parent=47 // pred_fallthru
        _
    $region48: #{tpu_custom_call.1} parent=5 // pred_fallthru
      _
  $region6: #{tpu_custom_call.1} parent=0 // loop_footer
    %s13 = sadd.s32 1, %s9
  $region7: #{tpu_custom_call.1} parent=0 // loop_footer_branch
    %8 = sbr.rel target = $region3
  $region8: #{tpu_custom_call.1} parent=0 // loop_exit
    _

</llo_original>
